<compile_context>
chip_gen: v5e
topology: v5e:2x2
jax: 0.10.0
libtpu: 0.0.40
codegen_flags: <defaults>
</compile_context>

<pallas_src>
import functools

import jax
import jax.numpy as jnp
import numpy as np
from jax.experimental import pallas as pl
from jax.experimental.pallas import tpu as pltpu


def _make_kernel(win: int, tau_min: int, tau_max: int, n_groups: int,
                 r_sh: int, sample_rate: float, threshold: float):

    def kernel(x_ref, f0_ref, xsh_ref):
        # x_ref:   (frame_length + 8, T) block; samples on sublanes, frames on lanes.
        # xsh_ref: (8, r_sh, T) VMEM scratch of sublane-realigned shifted copies.
        xv = x_ref[...]
        for j in range(8):
            xsh_ref[j, :, :] = xv[j:j + r_sh, :]

        x0 = xv[:win, :]                                     # (win, T)
        t = x0.shape[1]

        big = jnp.float32(3.0e38)
        init = (jnp.zeros((1, t), jnp.float32),              # running csum of d(tau)
                jnp.full((1, t), big, jnp.float32),          # running CMNDF minimum
                jnp.full((1, t), float(tau_min), jnp.float32))  # best tau

        def body(g, carry):
            csum, mval, mtau = carry
            base = pl.multiple_of(g * 8, 8)
            for j in range(8):                               # static unroll of 8
                tau = base + j
                xs = xsh_ref[j, pl.ds(base, win), :]         # aligned dynamic slice
                diff = x0 - xs
                d = jnp.sum(diff * diff, axis=0, keepdims=True)   # (1, T)
                csum = csum + d
                tau_f = tau.astype(jnp.float32)
                inv = pl.reciprocal(jnp.maximum(csum, jnp.float32(1e-12)),
                                    approx=True)
                cmndf = d * tau_f * inv
                valid = jnp.logical_and(tau >= tau_min, tau <= tau_max)
                better = jnp.logical_and(valid, cmndf < mval)
                mval = jnp.where(better, cmndf, mval)
                mtau = jnp.where(better, tau_f, mtau)
            return csum, mval, mtau

        csum, mval, mtau = jax.lax.fori_loop(0, n_groups, body, init)

        # Voicing decision (fixed threshold) + silence guard: all-zero frames
        # have csum == 0 and must be reported unvoiced (f0 = 0.0, fill_na).
        voiced = jnp.logical_and(mval < jnp.float32(threshold),
                                 csum > jnp.float32(1e-9))
        f0 = jnp.where(voiced,
                       jnp.float32(sample_rate) / jnp.maximum(mtau, 1.0),
                       jnp.zeros_like(mtau))
        f0_ref[...] = f0.astype(jnp.float32)

    return kernel


@functools.partial(jax.jit, static_argnames=(
    "sample_rate", "hop_length", "f0_floor", "f0_ceiling", "frame_length",
    "input_magnitude", "voicing_threshold"))
def librosa_f0_estimate(x, *, sample_rate: int, hop_length: int,
                        f0_floor: float, f0_ceiling: float,
                        frame_length: int = 256,
                        input_magnitude=None,
                        voicing_threshold: float = 0.3):
    """x: (N, C, T) float signal -> f0: (N, C, num_frames) float32."""
    n, c, t = x.shape
    x = x.astype(jnp.float32)

    if input_magnitude is not None:
        # TODO(synk): signal_ops.safe_normalize_magnitude exact semantics unknown;
        # implemented as eps-guarded per-row peak normalization to target magnitude.
        peak = jnp.max(jnp.abs(x), axis=-1, keepdims=True)
        x = x * (float(input_magnitude) / jnp.maximum(peak, 1e-9))

    rows = x.reshape(n * c, t)

    # center=True, pad_mode='constant' framing (plain-JAX glue).
    # TODO(synk): gather-based framing expands memory ~frame_length/hop x; fine
    # here, could be replaced by in-kernel hop-strided DMA for very long audio.
    pad = frame_length // 2
    padded = jnp.pad(rows, ((0, 0), (pad, pad)))
    num_frames = 1 + t // hop_length
    idx = (jnp.arange(num_frames)[:, None] * hop_length
           + jnp.arange(frame_length)[None, :])
    frames = padded[:, idx]                                   # (R, F, L)

    # Lane-dense layout: samples on sublanes, (row, frame) folded onto lanes.
    r = n * c
    num_cols = r * num_frames
    cols = jnp.transpose(frames, (2, 0, 1)).reshape(frame_length, num_cols)

    # Lane tile sized to stay well inside scoped VMEM on v5e/v6e/v7x
    # (input block double-buffered + (8, r_sh, T) scratch + loop temporaries).
    lane_tile = min(512, ((num_cols + 127) // 128) * 128)
    num_tiles = (num_cols + lane_tile - 1) // lane_tile
    cols_pad = num_tiles * lane_tile

    # +8 zero sample rows so the 8 in-kernel shifted copies never read OOB.
    cols = jnp.pad(cols, ((0, 8), (0, cols_pad - num_cols)))
    l_pad = frame_length + 8

    win = frame_length // 2
    tau_min = max(1, int(np.floor(sample_rate / f0_ceiling)))
    tau_max = min(int(np.ceil(sample_rate / f0_floor)), frame_length - win - 1)
    tau_max = max(tau_max, tau_min)
    n_groups = (tau_max + 1 + 7) // 8           # lags processed: 0 .. 8*n_groups-1
    r_sh = 8 * (n_groups - 1) + win             # rows per shifted copy

    kernel = _make_kernel(win, tau_min, tau_max, n_groups, r_sh,
                          float(sample_rate), float(voicing_threshold))

    f0_flat = pl.pallas_call(
        kernel,
        out_shape=jax.ShapeDtypeStruct((1, cols_pad), jnp.float32),
        grid_spec=pltpu.PrefetchScalarGridSpec(
            num_scalar_prefetch=0,
            grid=(num_tiles,),
            in_specs=[pl.BlockSpec((l_pad, lane_tile), lambda i: (0, i))],
            out_specs=pl.BlockSpec((1, lane_tile), lambda i: (0, i)),
            scratch_shapes=[pltpu.VMEM((8, r_sh, lane_tile), jnp.float32)],
        ),
        compiler_params=pltpu.CompilerParams(
            dimension_semantics=("parallel",),
            vmem_limit_bytes=32 * 1024 * 1024),
    )(cols)

    f0 = f0_flat[0, :num_cols].reshape(n, c, num_frames)
    return f0


if __name__ == "__main__":
    key = jax.random.PRNGKey(0)
    n, c, t = 2, 1, 800
    sample_rate, hop_length, frame_length = 8000, 80, 256

    k_freq, k_noise = jax.random.split(key)
    times = jnp.arange(t, dtype=jnp.float32) / sample_rate
    freqs = jax.random.uniform(k_freq, (n, c, 1), minval=150.0, maxval=400.0)
    noise = 0.01 * jax.random.normal(k_noise, (n, c, t), dtype=jnp.float32)
    x = jnp.sin(2.0 * jnp.pi * freqs * times[None, None, :]) + noise

    f0 = librosa_f0_estimate(
        x,
        sample_rate=sample_rate,
        hop_length=hop_length,
        f0_floor=125.0,
        f0_ceiling=500.0,
        frame_length=frame_length,
        input_magnitude=0.9,
    )
    f0 = jax.block_until_ready(f0)

    assert f0.shape == (n, c, 1 + t // hop_length), f0.shape
    assert f0.dtype == jnp.float32
    assert bool(jnp.all(jnp.isfinite(f0)))
    assert bool(jnp.any(f0 > 0.0))
    print("KERNEL_OK")
</pallas_src>

<mosaic_0001>
module attributes {stable_mosaic.version = 11 : i64} {
  func.func @kernel(%arg0: i32, %arg1: memref<264x128xf32, #tpu.memory_space<vmem>>, %arg2: memref<1x128xf32, #tpu.memory_space<vmem>>, %arg3: memref<8x192x128xf32, #tpu.memory_space<vmem>>) attributes {dimension_semantics = [#tpu.dimension_semantics<parallel>], iteration_bounds = array<i64: 1>, scalar_prefetch = 0 : i64, scratch_operands = 1 : i64, tpu.core_type = #tpu.core_type<tc>, window_params = [{transform_indices = @transform_0, window_bounds = array<i64: 264, 128>}, {transform_indices = @transform_1, window_bounds = array<i64: 1, 128>}]} {
    %c0 = arith.constant 0 : index
    %c0_0 = arith.constant 0 : index
    %0 = vector.load %arg1[%c0, %c0_0] : memref<264x128xf32, #tpu.memory_space<vmem>>, vector<264x128xf32>
    %1 = vector.extract_strided_slice %0 {offsets = [0, 0], sizes = [192, 128], strides = [1, 1]} : vector<264x128xf32> to vector<192x128xf32>
    %c0_1 = arith.constant 0 : index
    %c0_2 = arith.constant 0 : index
    %c0_3 = arith.constant 0 : index
    %2 = vector.load %arg3[%c0_1, %c0_2, %c0_3] : memref<8x192x128xf32, #tpu.memory_space<vmem>>, vector<1x192x128xf32>
    %3 = vector.shape_cast %2 : vector<1x192x128xf32> to vector<192x128xf32>
    %4 = vector.shape_cast %1 : vector<192x128xf32> to vector<1x192x128xf32>
    tpu.vector_store %arg3[%c0_1, %c0_2, %c0_3], %4 {strides = array<i32>} : memref<8x192x128xf32, #tpu.memory_space<vmem>>, vector<1x192x128xf32>,
    %5 = vector.extract_strided_slice %0 {offsets = [1, 0], sizes = [192, 128], strides = [1, 1]} : vector<264x128xf32> to vector<192x128xf32>
    %c1 = arith.constant 1 : index
    %c0_4 = arith.constant 0 : index
    %c0_5 = arith.constant 0 : index
    %6 = vector.load %arg3[%c1, %c0_4, %c0_5] : memref<8x192x128xf32, #tpu.memory_space<vmem>>, vector<1x192x128xf32>
    %7 = vector.shape_cast %6 : vector<1x192x128xf32> to vector<192x128xf32>
    %8 = vector.shape_cast %5 : vector<192x128xf32> to vector<1x192x128xf32>
    tpu.vector_store %arg3[%c1, %c0_4, %c0_5], %8 {strides = array<i32>} : memref<8x192x128xf32, #tpu.memory_space<vmem>>, vector<1x192x128xf32>,
    %9 = vector.extract_strided_slice %0 {offsets = [2, 0], sizes = [192, 128], strides = [1, 1]} : vector<264x128xf32> to vector<192x128xf32>
    %c2 = arith.constant 2 : index
    %c0_6 = arith.constant 0 : index
    %c0_7 = arith.constant 0 : index
    %10 = vector.load %arg3[%c2, %c0_6, %c0_7] : memref<8x192x128xf32, #tpu.memory_space<vmem>>, vector<1x192x128xf32>
    %11 = vector.shape_cast %10 : vector<1x192x128xf32> to vector<192x128xf32>
    %12 = vector.shape_cast %9 : vector<192x128xf32> to vector<1x192x128xf32>
    tpu.vector_store %arg3[%c2, %c0_6, %c0_7], %12 {strides = array<i32>} : memref<8x192x128xf32, #tpu.memory_space<vmem>>, vector<1x192x128xf32>,
    %13 = vector.extract_strided_slice %0 {offsets = [3, 0], sizes = [192, 128], strides = [1, 1]} : vector<264x128xf32> to vector<192x128xf32>
    %c3 = arith.constant 3 : index
    %c0_8 = arith.constant 0 : index
    %c0_9 = arith.constant 0 : index
    %14 = vector.load %arg3[%c3, %c0_8, %c0_9] : memref<8x192x128xf32, #tpu.memory_space<vmem>>, vector<1x192x128xf32>
    %15 = vector.shape_cast %14 : vector<1x192x128xf32> to vector<192x128xf32>
    %16 = vector.shape_cast %13 : vector<192x128xf32> to vector<1x192x128xf32>
    tpu.vector_store %arg3[%c3, %c0_8, %c0_9], %16 {strides = array<i32>} : memref<8x192x128xf32, #tpu.memory_space<vmem>>, vector<1x192x128xf32>,
    %17 = vector.extract_strided_slice %0 {offsets = [4, 0], sizes = [192, 128], strides = [1, 1]} : vector<264x128xf32> to vector<192x128xf32>
    %c4 = arith.constant 4 : index
    %c0_10 = arith.constant 0 : index
    %c0_11 = arith.constant 0 : index
    %18 = vector.load %arg3[%c4, %c0_10, %c0_11] : memref<8x192x128xf32, #tpu.memory_space<vmem>>, vector<1x192x128xf32>
    %19 = vector.shape_cast %18 : vector<1x192x128xf32> to vector<192x128xf32>
    %20 = vector.shape_cast %17 : vector<192x128xf32> to vector<1x192x128xf32>
    tpu.vector_store %arg3[%c4, %c0_10, %c0_11], %20 {strides = array<i32>} : memref<8x192x128xf32, #tpu.memory_space<vmem>>, vector<1x192x128xf32>,
    %21 = vector.extract_strided_slice %0 {offsets = [5, 0], sizes = [192, 128], strides = [1, 1]} : vector<264x128xf32> to vector<192x128xf32>
    %c5 = arith.constant 5 : index
    %c0_12 = arith.constant 0 : index
    %c0_13 = arith.constant 0 : index
    %22 = vector.load %arg3[%c5, %c0_12, %c0_13] : memref<8x192x128xf32, #tpu.memory_space<vmem>>, vector<1x192x128xf32>
    %23 = vector.shape_cast %22 : vector<1x192x128xf32> to vector<192x128xf32>
    %24 = vector.shape_cast %21 : vector<192x128xf32> to vector<1x192x128xf32>
    tpu.vector_store %arg3[%c5, %c0_12, %c0_13], %24 {strides = array<i32>} : memref<8x192x128xf32, #tpu.memory_space<vmem>>, vector<1x192x128xf32>,
    %25 = vector.extract_strided_slice %0 {offsets = [6, 0], sizes = [192, 128], strides = [1, 1]} : vector<264x128xf32> to vector<192x128xf32>
    %c6 = arith.constant 6 : index
    %c0_14 = arith.constant 0 : index
    %c0_15 = arith.constant 0 : index
    %26 = vector.load %arg3[%c6, %c0_14, %c0_15] : memref<8x192x128xf32, #tpu.memory_space<vmem>>, vector<1x192x128xf32>
    %27 = vector.shape_cast %26 : vector<1x192x128xf32> to vector<192x128xf32>
    %28 = vector.shape_cast %25 : vector<192x128xf32> to vector<1x192x128xf32>
    tpu.vector_store %arg3[%c6, %c0_14, %c0_15], %28 {strides = array<i32>} : memref<8x192x128xf32, #tpu.memory_space<vmem>>, vector<1x192x128xf32>,
    %29 = vector.extract_strided_slice %0 {offsets = [7, 0], sizes = [192, 128], strides = [1, 1]} : vector<264x128xf32> to vector<192x128xf32>
    %c7 = arith.constant 7 : index
    %c0_16 = arith.constant 0 : index
    %c0_17 = arith.constant 0 : index
    %30 = vector.load %arg3[%c7, %c0_16, %c0_17] : memref<8x192x128xf32, #tpu.memory_space<vmem>>, vector<1x192x128xf32>
    %31 = vector.shape_cast %30 : vector<1x192x128xf32> to vector<192x128xf32>
    %32 = vector.shape_cast %29 : vector<192x128xf32> to vector<1x192x128xf32>
    tpu.vector_store %arg3[%c7, %c0_16, %c0_17], %32 {strides = array<i32>} : memref<8x192x128xf32, #tpu.memory_space<vmem>>, vector<1x192x128xf32>,
    %33 = vector.extract_strided_slice %0 {offsets = [0, 0], sizes = [128, 128], strides = [1, 1]} : vector<264x128xf32> to vector<128x128xf32>
    %cst = arith.constant 0.000000e+00 : f32
    %34 = vector.broadcast %cst : f32 to vector<1x128xf32>
    %cst_18 = arith.constant 3.000000e+38 : f32
    %35 = vector.broadcast %cst_18 : f32 to vector<1x128xf32>
    %cst_19 = arith.constant 1.600000e+01 : f32
    %36 = vector.broadcast %cst_19 : f32 to vector<1x128xf32>
    %c0_i32 = arith.constant 0 : i32
    %c9_i32 = arith.constant 9 : i32
    %37 = arith.addi %c0_i32, %c9_i32 : i32
    %c1_i32 = arith.constant 1 : i32
    %38:3 = scf.for %arg4 = %c0_i32 to %37 step %c1_i32 iter_args(%arg5 = %34, %arg6 = %35, %arg7 = %36) -> (vector<1x128xf32>, vector<1x128xf32>, vector<1x128xf32>)  : i32 {
      %c8_i32 = arith.constant 8 : i32
      %51 = arith.muli %arg4, %c8_i32 : i32
      %52 = tpu.assume_multiple %51, 8 : i32
      %c0_i32_28 = arith.constant 0 : i32
      %53 = arith.addi %52, %c0_i32_28 : i32
      %c0_29 = arith.constant 0 : index
      %54 = arith.index_cast %52 : i32 to index
      %c0_30 = arith.constant 0 : index
      %55 = vector.load %arg3[%c0_29, %54, %c0_30] : memref<8x192x128xf32, #tpu.memory_space<vmem>>, vector<1x128x128xf32>
      %56 = vector.shape_cast %55 : vector<1x128x128xf32> to vector<128x128xf32>
      %57 = arith.subf %33, %56 : vector<128x128xf32>
      %58 = arith.mulf %57, %57 : vector<128x128xf32>
      %cst_31 = arith.constant dense<0.000000e+00> : vector<128xf32>
      %59 = vector.multi_reduction <add>, %58, %cst_31 [0] : vector<128x128xf32> to vector<128xf32>
      %60 = vector.shape_cast %59 : vector<128xf32> to vector<1x128xf32>
      %61 = arith.addf %arg5, %60 : vector<1x128xf32>
      %62 = arith.sitofp %53 : i32 to f32
      %cst_32 = arith.constant 9.99999996E-13 : f32
      %63 = vector.broadcast %cst_32 : f32 to vector<1x128xf32>
      %64 = arith.maximumf %61, %63 : vector<1x128xf32>
      %65 = tpu.reciprocal %64 {approx = true} : vector<1x128xf32> -> vector<1x128xf32>
      %66 = vector.broadcast %62 : f32 to vector<1x128xf32>
      %67 = arith.mulf %60, %66 : vector<1x128xf32>
      %68 = arith.mulf %67, %65 : vector<1x128xf32>
      %c16_i32 = arith.constant 16 : i32
      %69 = arith.cmpi sge, %53, %c16_i32 : i32
      %c64_i32 = arith.constant 64 : i32
      %70 = arith.cmpi sle, %53, %c64_i32 : i32
      %71 = arith.andi %69, %70 : i1
      %72 = arith.cmpf olt, %68, %arg6 : vector<1x128xf32>
      %73 = vector.broadcast %71 : i1 to vector<1x128xi1>
      %74 = arith.andi %73, %72 : vector<1x128xi1>
      %75 = arith.select %74, %68, %arg6 : vector<1x128xi1>, vector<1x128xf32>
      %76 = vector.broadcast %62 : f32 to vector<1x128xf32>
      %77 = arith.select %74, %76, %arg7 : vector<1x128xi1>, vector<1x128xf32>
      %c1_i32_33 = arith.constant 1 : i32
      %78 = arith.addi %52, %c1_i32_33 : i32
      %c1_34 = arith.constant 1 : index
      %79 = arith.index_cast %52 : i32 to index
      %c0_35 = arith.constant 0 : index
      %80 = vector.load %arg3[%c1_34, %79, %c0_35] : memref<8x192x128xf32, #tpu.memory_space<vmem>>, vector<1x128x128xf32>
      %81 = vector.shape_cast %80 : vector<1x128x128xf32> to vector<128x128xf32>
      %82 = arith.subf %33, %81 : vector<128x128xf32>
      %83 = arith.mulf %82, %82 : vector<128x128xf32>
      %cst_36 = arith.constant dense<0.000000e+00> : vector<128xf32>
      %84 = vector.multi_reduction <add>, %83, %cst_36 [0] : vector<128x128xf32> to vector<128xf32>
      %85 = vector.shape_cast %84 : vector<128xf32> to vector<1x128xf32>
      %86 = arith.addf %61, %85 : vector<1x128xf32>
      %87 = arith.sitofp %78 : i32 to f32
      %cst_37 = arith.constant 9.99999996E-13 : f32
      %88 = vector.broadcast %cst_37 : f32 to vector<1x128xf32>
      %89 = arith.maximumf %86, %88 : vector<1x128xf32>
      %90 = tpu.reciprocal %89 {approx = true} : vector<1x128xf32> -> vector<1x128xf32>
      %91 = vector.broadcast %87 : f32 to vector<1x128xf32>
      %92 = arith.mulf %85, %91 : vector<1x128xf32>
      %93 = arith.mulf %92, %90 : vector<1x128xf32>
      %c16_i32_38 = arith.constant 16 : i32
      %94 = arith.cmpi sge, %78, %c16_i32_38 : i32
      %c64_i32_39 = arith.constant 64 : i32
      %95 = arith.cmpi sle, %78, %c64_i32_39 : i32
      %96 = arith.andi %94, %95 : i1
      %97 = arith.cmpf olt, %93, %75 : vector<1x128xf32>
      %98 = vector.broadcast %96 : i1 to vector<1x128xi1>
      %99 = arith.andi %98, %97 : vector<1x128xi1>
      %100 = arith.select %99, %93, %75 : vector<1x128xi1>, vector<1x128xf32>
      %101 = vector.broadcast %87 : f32 to vector<1x128xf32>
      %102 = arith.select %99, %101, %77 : vector<1x128xi1>, vector<1x128xf32>
      %c2_i32 = arith.constant 2 : i32
      %103 = arith.addi %52, %c2_i32 : i32
      %c2_40 = arith.constant 2 : index
      %104 = arith.index_cast %52 : i32 to index
      %c0_41 = arith.constant 0 : index
      %105 = vector.load %arg3[%c2_40, %104, %c0_41] : memref<8x192x128xf32, #tpu.memory_space<vmem>>, vector<1x128x128xf32>
      %106 = vector.shape_cast %105 : vector<1x128x128xf32> to vector<128x128xf32>
      %107 = arith.subf %33, %106 : vector<128x128xf32>
      %108 = arith.mulf %107, %107 : vector<128x128xf32>
      %cst_42 = arith.constant dense<0.000000e+00> : vector<128xf32>
      %109 = vector.multi_reduction <add>, %108, %cst_42 [0] : vector<128x128xf32> to vector<128xf32>
      %110 = vector.shape_cast %109 : vector<128xf32> to vector<1x128xf32>
      %111 = arith.addf %86, %110 : vector<1x128xf32>
      %112 = arith.sitofp %103 : i32 to f32
      %cst_43 = arith.constant 9.99999996E-13 : f32
      %113 = vector.broadcast %cst_43 : f32 to vector<1x128xf32>
      %114 = arith.maximumf %111, %113 : vector<1x128xf32>
      %115 = tpu.reciprocal %114 {approx = true} : vector<1x128xf32> -> vector<1x128xf32>
      %116 = vector.broadcast %112 : f32 to vector<1x128xf32>
      %117 = arith.mulf %110, %116 : vector<1x128xf32>
      %118 = arith.mulf %117, %115 : vector<1x128xf32>
      %c16_i32_44 = arith.constant 16 : i32
      %119 = arith.cmpi sge, %103, %c16_i32_44 : i32
      %c64_i32_45 = arith.constant 64 : i32
      %120 = arith.cmpi sle, %103, %c64_i32_45 : i32
      %121 = arith.andi %119, %120 : i1
      %122 = arith.cmpf olt, %118, %100 : vector<1x128xf32>
      %123 = vector.broadcast %121 : i1 to vector<1x128xi1>
      %124 = arith.andi %123, %122 : vector<1x128xi1>
      %125 = arith.select %124, %118, %100 : vector<1x128xi1>, vector<1x128xf32>
      %126 = vector.broadcast %112 : f32 to vector<1x128xf32>
      %127 = arith.select %124, %126, %102 : vector<1x128xi1>, vector<1x128xf32>
      %c3_i32 = arith.constant 3 : i32
      %128 = arith.addi %52, %c3_i32 : i32
      %c3_46 = arith.constant 3 : index
      %129 = arith.index_cast %52 : i32 to index
      %c0_47 = arith.constant 0 : index
      %130 = vector.load %arg3[%c3_46, %129, %c0_47] : memref<8x192x128xf32, #tpu.memory_space<vmem>>, vector<1x128x128xf32>
      %131 = vector.shape_cast %130 : vector<1x128x128xf32> to vector<128x128xf32>
      %132 = arith.subf %33, %131 : vector<128x128xf32>
      %133 = arith.mulf %132, %132 : vector<128x128xf32>
      %cst_48 = arith.constant dense<0.000000e+00> : vector<128xf32>
      %134 = vector.multi_reduction <add>, %133, %cst_48 [0] : vector<128x128xf32> to vector<128xf32>
      %135 = vector.shape_cast %134 : vector<128xf32> to vector<1x128xf32>
      %136 = arith.addf %111, %135 : vector<1x128xf32>
      %137 = arith.sitofp %128 : i32 to f32
      %cst_49 = arith.constant 9.99999996E-13 : f32
      %138 = vector.broadcast %cst_49 : f32 to vector<1x128xf32>
      %139 = arith.maximumf %136, %138 : vector<1x128xf32>
      %140 = tpu.reciprocal %139 {approx = true} : vector<1x128xf32> -> vector<1x128xf32>
      %141 = vector.broadcast %137 : f32 to vector<1x128xf32>
      %142 = arith.mulf %135, %141 : vector<1x128xf32>
      %143 = arith.mulf %142, %140 : vector<1x128xf32>
      %c16_i32_50 = arith.constant 16 : i32
      %144 = arith.cmpi sge, %128, %c16_i32_50 : i32
      %c64_i32_51 = arith.constant 64 : i32
      %145 = arith.cmpi sle, %128, %c64_i32_51 : i32
      %146 = arith.andi %144, %145 : i1
      %147 = arith.cmpf olt, %143, %125 : vector<1x128xf32>
      %148 = vector.broadcast %146 : i1 to vector<1x128xi1>
      %149 = arith.andi %148, %147 : vector<1x128xi1>
      %150 = arith.select %149, %143, %125 : vector<1x128xi1>, vector<1x128xf32>
      %151 = vector.broadcast %137 : f32 to vector<1x128xf32>
      %152 = arith.select %149, %151, %127 : vector<1x128xi1>, vector<1x128xf32>
      %c4_i32 = arith.constant 4 : i32
      %153 = arith.addi %52, %c4_i32 : i32
      %c4_52 = arith.constant 4 : index
      %154 = arith.index_cast %52 : i32 to index
      %c0_53 = arith.constant 0 : index
      %155 = vector.load %arg3[%c4_52, %154, %c0_53] : memref<8x192x128xf32, #tpu.memory_space<vmem>>, vector<1x128x128xf32>
      %156 = vector.shape_cast %155 : vector<1x128x128xf32> to vector<128x128xf32>
      %157 = arith.subf %33, %156 : vector<128x128xf32>
      %158 = arith.mulf %157, %157 : vector<128x128xf32>
      %cst_54 = arith.constant dense<0.000000e+00> : vector<128xf32>
      %159 = vector.multi_reduction <add>, %158, %cst_54 [0] : vector<128x128xf32> to vector<128xf32>
      %160 = vector.shape_cast %159 : vector<128xf32> to vector<1x128xf32>
      %161 = arith.addf %136, %160 : vector<1x128xf32>
      %162 = arith.sitofp %153 : i32 to f32
      %cst_55 = arith.constant 9.99999996E-13 : f32
      %163 = vector.broadcast %cst_55 : f32 to vector<1x128xf32>
      %164 = arith.maximumf %161, %163 : vector<1x128xf32>
      %165 = tpu.reciprocal %164 {approx = true} : vector<1x128xf32> -> vector<1x128xf32>
      %166 = vector.broadcast %162 : f32 to vector<1x128xf32>
      %167 = arith.mulf %160, %166 : vector<1x128xf32>
      %168 = arith.mulf %167, %165 : vector<1x128xf32>
      %c16_i32_56 = arith.constant 16 : i32
      %169 = arith.cmpi sge, %153, %c16_i32_56 : i32
      %c64_i32_57 = arith.constant 64 : i32
      %170 = arith.cmpi sle, %153, %c64_i32_57 : i32
      %171 = arith.andi %169, %170 : i1
      %172 = arith.cmpf olt, %168, %150 : vector<1x128xf32>
      %173 = vector.broadcast %171 : i1 to vector<1x128xi1>
      %174 = arith.andi %173, %172 : vector<1x128xi1>
      %175 = arith.select %174, %168, %150 : vector<1x128xi1>, vector<1x128xf32>
      %176 = vector.broadcast %162 : f32 to vector<1x128xf32>
      %177 = arith.select %174, %176, %152 : vector<1x128xi1>, vector<1x128xf32>
      %c5_i32 = arith.constant 5 : i32
      %178 = arith.addi %52, %c5_i32 : i32
      %c5_58 = arith.constant 5 : index
      %179 = arith.index_cast %52 : i32 to index
      %c0_59 = arith.constant 0 : index
      %180 = vector.load %arg3[%c5_58, %179, %c0_59] : memref<8x192x128xf32, #tpu.memory_space<vmem>>, vector<1x128x128xf32>
      %181 = vector.shape_cast %180 : vector<1x128x128xf32> to vector<128x128xf32>
      %182 = arith.subf %33, %181 : vector<128x128xf32>
      %183 = arith.mulf %182, %182 : vector<128x128xf32>
      %cst_60 = arith.constant dense<0.000000e+00> : vector<128xf32>
      %184 = vector.multi_reduction <add>, %183, %cst_60 [0] : vector<128x128xf32> to vector<128xf32>
      %185 = vector.shape_cast %184 : vector<128xf32> to vector<1x128xf32>
      %186 = arith.addf %161, %185 : vector<1x128xf32>
      %187 = arith.sitofp %178 : i32 to f32
      %cst_61 = arith.constant 9.99999996E-13 : f32
      %188 = vector.broadcast %cst_61 : f32 to vector<1x128xf32>
      %189 = arith.maximumf %186, %188 : vector<1x128xf32>
      %190 = tpu.reciprocal %189 {approx = true} : vector<1x128xf32> -> vector<1x128xf32>
      %191 = vector.broadcast %187 : f32 to vector<1x128xf32>
      %192 = arith.mulf %185, %191 : vector<1x128xf32>
      %193 = arith.mulf %192, %190 : vector<1x128xf32>
      %c16_i32_62 = arith.constant 16 : i32
      %194 = arith.cmpi sge, %178, %c16_i32_62 : i32
      %c64_i32_63 = arith.constant 64 : i32
      %195 = arith.cmpi sle, %178, %c64_i32_63 : i32
      %196 = arith.andi %194, %195 : i1
      %197 = arith.cmpf olt, %193, %175 : vector<1x128xf32>
      %198 = vector.broadcast %196 : i1 to vector<1x128xi1>
      %199 = arith.andi %198, %197 : vector<1x128xi1>
      %200 = arith.select %199, %193, %175 : vector<1x128xi1>, vector<1x128xf32>
      %201 = vector.broadcast %187 : f32 to vector<1x128xf32>
      %202 = arith.select %199, %201, %177 : vector<1x128xi1>, vector<1x128xf32>
      %c6_i32 = arith.constant 6 : i32
      %203 = arith.addi %52, %c6_i32 : i32
      %c6_64 = arith.constant 6 : index
      %204 = arith.index_cast %52 : i32 to index
      %c0_65 = arith.constant 0 : index
      %205 = vector.load %arg3[%c6_64, %204, %c0_65] : memref<8x192x128xf32, #tpu.memory_space<vmem>>, vector<1x128x128xf32>
      %206 = vector.shape_cast %205 : vector<1x128x128xf32> to vector<128x128xf32>
      %207 = arith.subf %33, %206 : vector<128x128xf32>
      %208 = arith.mulf %207, %207 : vector<128x128xf32>
      %cst_66 = arith.constant dense<0.000000e+00> : vector<128xf32>
      %209 = vector.multi_reduction <add>, %208, %cst_66 [0] : vector<128x128xf32> to vector<128xf32>
      %210 = vector.shape_cast %209 : vector<128xf32> to vector<1x128xf32>
      %211 = arith.addf %186, %210 : vector<1x128xf32>
      %212 = arith.sitofp %203 : i32 to f32
      %cst_67 = arith.constant 9.99999996E-13 : f32
      %213 = vector.broadcast %cst_67 : f32 to vector<1x128xf32>
      %214 = arith.maximumf %211, %213 : vector<1x128xf32>
      %215 = tpu.reciprocal %214 {approx = true} : vector<1x128xf32> -> vector<1x128xf32>
      %216 = vector.broadcast %212 : f32 to vector<1x128xf32>
      %217 = arith.mulf %210, %216 : vector<1x128xf32>
      %218 = arith.mulf %217, %215 : vector<1x128xf32>
      %c16_i32_68 = arith.constant 16 : i32
      %219 = arith.cmpi sge, %203, %c16_i32_68 : i32
      %c64_i32_69 = arith.constant 64 : i32
      %220 = arith.cmpi sle, %203, %c64_i32_69 : i32
      %221 = arith.andi %219, %220 : i1
      %222 = arith.cmpf olt, %218, %200 : vector<1x128xf32>
      %223 = vector.broadcast %221 : i1 to vector<1x128xi1>
      %224 = arith.andi %223, %222 : vector<1x128xi1>
      %225 = arith.select %224, %218, %200 : vector<1x128xi1>, vector<1x128xf32>
      %226 = vector.broadcast %212 : f32 to vector<1x128xf32>
      %227 = arith.select %224, %226, %202 : vector<1x128xi1>, vector<1x128xf32>
      %c7_i32 = arith.constant 7 : i32
      %228 = arith.addi %52, %c7_i32 : i32
      %c7_70 = arith.constant 7 : index
      %229 = arith.index_cast %52 : i32 to index
      %c0_71 = arith.constant 0 : index
      %230 = vector.load %arg3[%c7_70, %229, %c0_71] : memref<8x192x128xf32, #tpu.memory_space<vmem>>, vector<1x128x128xf32>
      %231 = vector.shape_cast %230 : vector<1x128x128xf32> to vector<128x128xf32>
      %232 = arith.subf %33, %231 : vector<128x128xf32>
      %233 = arith.mulf %232, %232 : vector<128x128xf32>
      %cst_72 = arith.constant dense<0.000000e+00> : vector<128xf32>
      %234 = vector.multi_reduction <add>, %233, %cst_72 [0] : vector<128x128xf32> to vector<128xf32>
      %235 = vector.shape_cast %234 : vector<128xf32> to vector<1x128xf32>
      %236 = arith.addf %211, %235 : vector<1x128xf32>
      %237 = arith.sitofp %228 : i32 to f32
      %cst_73 = arith.constant 9.99999996E-13 : f32
      %238 = vector.broadcast %cst_73 : f32 to vector<1x128xf32>
      %239 = arith.maximumf %236, %238 : vector<1x128xf32>
      %240 = tpu.reciprocal %239 {approx = true} : vector<1x128xf32> -> vector<1x128xf32>
      %241 = vector.broadcast %237 : f32 to vector<1x128xf32>
      %242 = arith.mulf %235, %241 : vector<1x128xf32>
      %243 = arith.mulf %242, %240 : vector<1x128xf32>
      %c16_i32_74 = arith.constant 16 : i32
      %244 = arith.cmpi sge, %228, %c16_i32_74 : i32
      %c64_i32_75 = arith.constant 64 : i32
      %245 = arith.cmpi sle, %228, %c64_i32_75 : i32
      %246 = arith.andi %244, %245 : i1
      %247 = arith.cmpf olt, %243, %225 : vector<1x128xf32>
      %248 = vector.broadcast %246 : i1 to vector<1x128xi1>
      %249 = arith.andi %248, %247 : vector<1x128xi1>
      %250 = arith.select %249, %243, %225 : vector<1x128xi1>, vector<1x128xf32>
      %251 = vector.broadcast %237 : f32 to vector<1x128xf32>
      %252 = arith.select %249, %251, %227 : vector<1x128xi1>, vector<1x128xf32>
      scf.yield %236, %250, %252 : vector<1x128xf32>, vector<1x128xf32>, vector<1x128xf32>
    }
    %c9_i32_20 = arith.constant 9 : i32
    %cst_21 = arith.constant 3.000000e-01 : f32
    %39 = vector.broadcast %cst_21 : f32 to vector<1x128xf32>
    %40 = arith.cmpf olt, %38#1, %39 : vector<1x128xf32>
    %cst_22 = arith.constant 9.99999971E-10 : f32
    %41 = vector.broadcast %cst_22 : f32 to vector<1x128xf32>
    %42 = arith.cmpf ogt, %38#0, %41 : vector<1x128xf32>
    %43 = arith.andi %40, %42 : vector<1x128xi1>
    %cst_23 = arith.constant 1.000000e+00 : f32
    %44 = vector.broadcast %cst_23 : f32 to vector<1x128xf32>
    %45 = arith.maximumf %38#2, %44 : vector<1x128xf32>
    %cst_24 = arith.constant 8.000000e+03 : f32
    %46 = vector.broadcast %cst_24 : f32 to vector<1x128xf32>
    %47 = arith.divf %46, %45 : vector<1x128xf32>
    %cst_25 = arith.constant 0.000000e+00 : f32
    %48 = vector.broadcast %cst_25 : f32 to vector<1x128xf32>
    %49 = arith.select %43, %47, %48 : vector<1x128xi1>, vector<1x128xf32>
    %c0_26 = arith.constant 0 : index
    %c0_27 = arith.constant 0 : index
    %50 = vector.load %arg2[%c0_26, %c0_27] : memref<1x128xf32, #tpu.memory_space<vmem>>, vector<1x128xf32>
    tpu.vector_store %arg2[%c0_26, %c0_27], %49 {strides = array<i32>} : memref<1x128xf32, #tpu.memory_space<vmem>>, vector<1x128xf32>,
    return
  }
  func.func @transform_0(%arg0: i32) -> (i32, i32) {
    %c0_i32 = arith.constant 0 : i32
    %c0_i32_0 = arith.constant 0 : i32
    return %c0_i32, %arg0 : i32, i32
  }
  func.func @transform_1(%arg0: i32) -> (i32, i32) {
    %c0_i32 = arith.constant 0 : i32
    %c0_i32_0 = arith.constant 0 : i32
    return %c0_i32, %arg0 : i32, i32
  }
}

</mosaic_0001>

<llo_original>
// kernel: squeeze.1
$region0: #{squeeze.1}
  %s0 = inlined_call_operand.vmem [shape: f32[22], index: 0, kind: input, shape index: {}]
  %s1 = inlined_call_operand.hbm [shape: f32[2,1,11], index: 1, kind: output, shape index: {}]
  $region1: #{squeeze.1} parent=0
    #allocation0 [shape = 'u8[1024]{0}', space=vmem, size = 0x400, scoped, tag = 'operand span for operand 1']
    #allocation1 [shape = 's32[1]{0}', space=sflag, size = 0x4, scoped, tag = 'scoped memory for squeeze.1']
    #allocation2 [shape = 'u8[4096]{0}', space=vmem, size = 0x1000, scoped, tag = 'scoped mem for output reshape']
    #allocation3 [shape = 'u8[4096]{0}', space=vmem, size = 0x1000, scoped, tag = 'scoped mem for input reshape']
    %2 = vsyncpa [#allocation1], 0
    %s4 = ssub.s32 2, 1
    %v5 = vld [vmem:[%s0] sm:%s4]
    %6 = vst [vmem:[#allocation3] sm:%s4] %v5
    %v7 = vld [vmem:[#allocation3] sm:$0x1]
    %vm8 = vcmask 89088
    %9 = vst.msk [vmem:[#allocation2] sm:$0x1] %vm8, %v7
    %v10 = vld [vmem:[#allocation3] sm:$0x1]
    %11 = vrot.lane.b32.xlu0 %v10, 117
    %v12 = vpop.permute.xlu0 %11
    %vm13 = vcmask 89088
    %s14 = scalar_lea.vmem [#allocation2], 1
    %15 = vst.msk [vmem:[%s14] sm:$0x1] %vm13, %v12
    %s17 = ssub.s32 4, 1
    %v18 = vld [vmem:[#allocation2] sm:%s17]
    %s20 = ssub.s32 4, 1
    %21 = vst [vmem:[#allocation0] sm:%s20] %v18
    %23 = vsyncadd [#allocation1], 0
    %s25 = sshll.u32 [#allocation0], 4
    %s26 = int_to_ptr.vmem [resolvable:$true] %s25
    %s27 = sshll.u32 %s1, 4
    %s28 = int_to_ptr.hbm [resolvable:$true] %s27
    %30 = dma.vmem_to_hbm [thread:$0]  %s26, 32, %s28, [#allocation1]
    %32 = dma.done [#allocation1], 32
    %33 = vsyncpa [#allocation1], 1

// kernel: librosa_f0_estimate.1
$region0: #{librosa_f0_estimate.1}
  #allocation0 [shape = 'u32[]', space=smem, size = 0x4, offset = 0x4, fixed_abs, tag = 'smem constant byte address 0x4 - core index']
  #allocation1 [shape = 'u32[72,128]{1,0:T(1,128)}', space=vmem, size = 0x9000, scoped, tag = 'internal scratch']
  #allocation2 [shape = 'f32[8,192,128]{2,1,0:T(8,128)}', space=vmem, size = 0xc0000, scoped, tag = 'scratch operand']
  %s0 = inlined_call_operand.vmem [shape: f32[264,128], index: 0, kind: input, shape index: {}]
  %s1 = inlined_call_operand.vmem [shape: f32[1,128], index: 1, kind: output, shape index: {}]
  %s2 = sld [smem:[#allocation0]]
  $region21: #{librosa_f0_estimate.1} parent=0
    _
  %s4 = ssub.s32 1, %s2
  %s5 = scalar_select 0, %s4, %s2
  // Predicated region
  $region2: #{librosa_f0_estimate.1} parent=0 // pred_check
    _
  $region3: #{librosa_f0_estimate.1} parent=0 // pred_check_branch
    %7 = sbr.rel (0) target = $region5
  $region4: #{librosa_f0_estimate.1} parent=0 // pred_region
    _
  $region5: #{librosa_f0_estimate.1} parent=0 // pred_fallthru
    _
  %v8 = vld [vmem:[%s0] sm:$0xff]
  %v9 = vld [vmem:[%s0 + $0x8] sm:$0xff]
  %v10 = vld [vmem:[%s0 + $0x10] sm:$0xff]
  %v11 = vld [vmem:[%s0 + $0x18] sm:$0xff]
  %v12 = vld [vmem:[%s0 + $0x20] sm:$0xff]
  %v13 = vld [vmem:[%s0 + $0x28] sm:$0xff]
  %v14 = vld [vmem:[%s0 + $0x30] sm:$0xff]
  %v15 = vld [vmem:[%s0 + $0x38] sm:$0xff]
  %v16 = vld [vmem:[%s0 + $0x40] sm:$0xff]
  %v17 = vld [vmem:[%s0 + $0x48] sm:$0xff]
  %v18 = vld [vmem:[%s0 + $0x50] sm:$0xff]
  %v19 = vld [vmem:[%s0 + $0x58] sm:$0xff]
  %v20 = vld [vmem:[%s0 + $0x60] sm:$0xff]
  %v21 = vld [vmem:[%s0 + $0x68] sm:$0xff]
  %v22 = vld [vmem:[%s0 + $0x70] sm:$0xff]
  %v23 = vld [vmem:[%s0 + $0x78] sm:$0xff]
  %v24 = vld [vmem:[%s0 + $0x80] sm:$0xff]
  %v25 = vld [vmem:[%s0 + $0x88] sm:$0xff]
  %v26 = vld [vmem:[%s0 + $0x90] sm:$0xff]
  %v27 = vld [vmem:[%s0 + $0x98] sm:$0xff]
  %v28 = vld [vmem:[%s0 + $0xa0] sm:$0xff]
  %v29 = vld [vmem:[%s0 + $0xa8] sm:$0xff]
  %v30 = vld [vmem:[%s0 + $0xb0] sm:$0xff]
  %v31 = vld [vmem:[%s0 + $0xb8] sm:$0xff]
  %v32 = vld [vmem:[%s0 + $0xc0] sm:$0xff]
  %33 = vst [vmem:[#allocation2] sm:$0xff] %v8
  %34 = vst [vmem:[#allocation2 + $0x8] sm:$0xff] %v9
  %35 = vst [vmem:[#allocation2 + $0x10] sm:$0xff] %v10
  %36 = vst [vmem:[#allocation2 + $0x18] sm:$0xff] %v11
  %37 = vst [vmem:[#allocation2 + $0x20] sm:$0xff] %v12
  %38 = vst [vmem:[#allocation2 + $0x28] sm:$0xff] %v13
  %39 = vst [vmem:[#allocation2 + $0x30] sm:$0xff] %v14
  %40 = vst [vmem:[#allocation2 + $0x38] sm:$0xff] %v15
  %41 = vst [vmem:[#allocation2 + $0x40] sm:$0xff] %v16
  %42 = vst [vmem:[#allocation2 + $0x48] sm:$0xff] %v17
  %43 = vst [vmem:[#allocation2 + $0x50] sm:$0xff] %v18
  %44 = vst [vmem:[#allocation2 + $0x58] sm:$0xff] %v19
  %45 = vst [vmem:[#allocation2 + $0x60] sm:$0xff] %v20
  %46 = vst [vmem:[#allocation2 + $0x68] sm:$0xff] %v21
  %47 = vst [vmem:[#allocation2 + $0x70] sm:$0xff] %v22
  %48 = vst [vmem:[#allocation2 + $0x78] sm:$0xff] %v23
  %49 = vst [vmem:[#allocation2 + $0x80] sm:$0xff] %v24
  %50 = vst [vmem:[#allocation2 + $0x88] sm:$0xff] %v25
  %51 = vst [vmem:[#allocation2 + $0x90] sm:$0xff] %v26
  %52 = vst [vmem:[#allocation2 + $0x98] sm:$0xff] %v27
  %53 = vst [vmem:[#allocation2 + $0xa0] sm:$0xff] %v28
  %54 = vst [vmem:[#allocation2 + $0xa8] sm:$0xff] %v29
  %55 = vst [vmem:[#allocation2 + $0xb0] sm:$0xff] %v30
  %56 = vst [vmem:[#allocation2 + $0xb8] sm:$0xff] %v31
  %s57 = scalar_lea.vmem [#allocation2], 192
  %58 = vst [vmem:[%s57 - $0x1] sm:$0xfe] %v8
  %59 = vst [vmem:[%s57 + $0x7] sm:$0xff] %v9
  %60 = vst [vmem:[%s57 + $0xf] sm:$0xff] %v10
  %61 = vst [vmem:[%s57 + $0x17] sm:$0xff] %v11
  %62 = vst [vmem:[%s57 + $0x1f] sm:$0xff] %v12
  %63 = vst [vmem:[%s57 + $0x27] sm:$0xff] %v13
  %64 = vst [vmem:[%s57 + $0x2f] sm:$0xff] %v14
  %65 = vst [vmem:[%s57 + $0x37] sm:$0xff] %v15
  %66 = vst [vmem:[%s57 + $0x3f] sm:$0xff] %v16
  %67 = vst [vmem:[%s57 + $0x47] sm:$0xff] %v17
  %68 = vst [vmem:[%s57 + $0x4f] sm:$0xff] %v18
  %69 = vst [vmem:[%s57 + $0x57] sm:$0xff] %v19
  %70 = vst [vmem:[%s57 + $0x5f] sm:$0xff] %v20
  %71 = vst [vmem:[%s57 + $0x67] sm:$0xff] %v21
  %72 = vst [vmem:[%s57 + $0x6f] sm:$0xff] %v22
  %73 = vst [vmem:[%s57 + $0x77] sm:$0xff] %v23
  %74 = vst [vmem:[%s57 + $0x7f] sm:$0xff] %v24
  %75 = vst [vmem:[%s57 + $0x87] sm:$0xff] %v25
  %76 = vst [vmem:[%s57 + $0x8f] sm:$0xff] %v26
  %77 = vst [vmem:[%s57 + $0x97] sm:$0xff] %v27
  %78 = vst [vmem:[%s57 + $0x9f] sm:$0xff] %v28
  %79 = vst [vmem:[%s57 + $0xa7] sm:$0xff] %v29
  %80 = vst [vmem:[%s57 + $0xaf] sm:$0xff] %v30
  %81 = vst [vmem:[%s57 + $0xb7] sm:$0xff] %v31
  %82 = vst [vmem:[%s57 + $0xbf] sm:$0x1] %v32
  %s83 = scalar_lea.vmem [#allocation2], 384
  %84 = vst [vmem:[%s83 - $0x2] sm:$0xfc] %v8
  %85 = vst [vmem:[%s83 + $0x6] sm:$0xff] %v9
  %86 = vst [vmem:[%s83 + $0xe] sm:$0xff] %v10
  %87 = vst [vmem:[%s83 + $0x16] sm:$0xff] %v11
  %88 = vst [vmem:[%s83 + $0x1e] sm:$0xff] %v12
  %89 = vst [vmem:[%s83 + $0x26] sm:$0xff] %v13
  %90 = vst [vmem:[%s83 + $0x2e] sm:$0xff] %v14
  %91 = vst [vmem:[%s83 + $0x36] sm:$0xff] %v15
  %92 = vst [vmem:[%s83 + $0x3e] sm:$0xff] %v16
  %93 = vst [vmem:[%s83 + $0x46] sm:$0xff] %v17
  %94 = vst [vmem:[%s83 + $0x4e] sm:$0xff] %v18
  %95 = vst [vmem:[%s83 + $0x56] sm:$0xff] %v19
  %96 = vst [vmem:[%s83 + $0x5e] sm:$0xff] %v20
  %97 = vst [vmem:[%s83 + $0x66] sm:$0xff] %v21
  %98 = vst [vmem:[%s83 + $0x6e] sm:$0xff] %v22
  %99 = vst [vmem:[%s83 + $0x76] sm:$0xff] %v23
  %100 = vst [vmem:[%s83 + $0x7e] sm:$0xff] %v24
  %101 = vst [vmem:[%s83 + $0x86] sm:$0xff] %v25
  %102 = vst [vmem:[%s83 + $0x8e] sm:$0xff] %v26
  %103 = vst [vmem:[%s83 + $0x96] sm:$0xff] %v27
  %104 = vst [vmem:[%s83 + $0x9e] sm:$0xff] %v28
  %105 = vst [vmem:[%s83 + $0xa6] sm:$0xff] %v29
  %106 = vst [vmem:[%s83 + $0xae] sm:$0xff] %v30
  %107 = vst [vmem:[%s83 + $0xb6] sm:$0xff] %v31
  %108 = vst [vmem:[%s83 + $0xbe] sm:$0x3] %v32
  %s109 = scalar_lea.vmem [#allocation2], 576
  %110 = vst [vmem:[%s109 - $0x3] sm:$0xf8] %v8
  %111 = vst [vmem:[%s109 + $0x5] sm:$0xff] %v9
  %112 = vst [vmem:[%s109 + $0xd] sm:$0xff] %v10
  %113 = vst [vmem:[%s109 + $0x15] sm:$0xff] %v11
  %114 = vst [vmem:[%s109 + $0x1d] sm:$0xff] %v12
  %115 = vst [vmem:[%s109 + $0x25] sm:$0xff] %v13
  %116 = vst [vmem:[%s109 + $0x2d] sm:$0xff] %v14
  %117 = vst [vmem:[%s109 + $0x35] sm:$0xff] %v15
  %118 = vst [vmem:[%s109 + $0x3d] sm:$0xff] %v16
  %119 = vst [vmem:[%s109 + $0x45] sm:$0xff] %v17
  %120 = vst [vmem:[%s109 + $0x4d] sm:$0xff] %v18
  %121 = vst [vmem:[%s109 + $0x55] sm:$0xff] %v19
  %122 = vst [vmem:[%s109 + $0x5d] sm:$0xff] %v20
  %123 = vst [vmem:[%s109 + $0x65] sm:$0xff] %v21
  %124 = vst [vmem:[%s109 + $0x6d] sm:$0xff] %v22
  %125 = vst [vmem:[%s109 + $0x75] sm:$0xff] %v23
  %126 = vst [vmem:[%s109 + $0x7d] sm:$0xff] %v24
  %127 = vst [vmem:[%s109 + $0x85] sm:$0xff] %v25
  %128 = vst [vmem:[%s109 + $0x8d] sm:$0xff] %v26
  %129 = vst [vmem:[%s109 + $0x95] sm:$0xff] %v27
  %130 = vst [vmem:[%s109 + $0x9d] sm:$0xff] %v28
  %131 = vst [vmem:[%s109 + $0xa5] sm:$0xff] %v29
  %132 = vst [vmem:[%s109 + $0xad] sm:$0xff] %v30
  %133 = vst [vmem:[%s109 + $0xb5] sm:$0xff] %v31
  %134 = vst [vmem:[%s109 + $0xbd] sm:$0x7] %v32
  %s135 = scalar_lea.vmem [#allocation2], 768
  %136 = vst [vmem:[%s135 - $0x4] sm:$0xf0] %v8
  %137 = vst [vmem:[%s135 + $0x4] sm:$0xff] %v9
  %138 = vst [vmem:[%s135 + $0xc] sm:$0xff] %v10
  %139 = vst [vmem:[%s135 + $0x14] sm:$0xff] %v11
  %140 = vst [vmem:[%s135 + $0x1c] sm:$0xff] %v12
  %141 = vst [vmem:[%s135 + $0x24] sm:$0xff] %v13
  %142 = vst [vmem:[%s135 + $0x2c] sm:$0xff] %v14
  %143 = vst [vmem:[%s135 + $0x34] sm:$0xff] %v15
  %144 = vst [vmem:[%s135 + $0x3c] sm:$0xff] %v16
  %145 = vst [vmem:[%s135 + $0x44] sm:$0xff] %v17
  %146 = vst [vmem:[%s135 + $0x4c] sm:$0xff] %v18
  %147 = vst [vmem:[%s135 + $0x54] sm:$0xff] %v19
  %148 = vst [vmem:[%s135 + $0x5c] sm:$0xff] %v20
  %149 = vst [vmem:[%s135 + $0x64] sm:$0xff] %v21
  %150 = vst [vmem:[%s135 + $0x6c] sm:$0xff] %v22
  %151 = vst [vmem:[%s135 + $0x74] sm:$0xff] %v23
  %152 = vst [vmem:[%s135 + $0x7c] sm:$0xff] %v24
  %153 = vst [vmem:[%s135 + $0x84] sm:$0xff] %v25
  %154 = vst [vmem:[%s135 + $0x8c] sm:$0xff] %v26
  %155 = vst [vmem:[%s135 + $0x94] sm:$0xff] %v27
  %156 = vst [vmem:[%s135 + $0x9c] sm:$0xff] %v28
  %157 = vst [vmem:[%s135 + $0xa4] sm:$0xff] %v29
  %158 = vst [vmem:[%s135 + $0xac] sm:$0xff] %v30
  %159 = vst [vmem:[%s135 + $0xb4] sm:$0xff] %v31
  %160 = vst [vmem:[%s135 + $0xbc] sm:$0xf] %v32
  %s161 = scalar_lea.vmem [#allocation2], 960
  %162 = vst [vmem:[%s161 - $0x5] sm:$0xe0] %v8
  %163 = vst [vmem:[%s161 + $0x3] sm:$0xff] %v9
  %164 = vst [vmem:[%s161 + $0xb] sm:$0xff] %v10
  %165 = vst [vmem:[%s161 + $0x13] sm:$0xff] %v11
  %166 = vst [vmem:[%s161 + $0x1b] sm:$0xff] %v12
  %167 = vst [vmem:[%s161 + $0x23] sm:$0xff] %v13
  %168 = vst [vmem:[%s161 + $0x2b] sm:$0xff] %v14
  %169 = vst [vmem:[%s161 + $0x33] sm:$0xff] %v15
  %170 = vst [vmem:[%s161 + $0x3b] sm:$0xff] %v16
  %171 = vst [vmem:[%s161 + $0x43] sm:$0xff] %v17
  %172 = vst [vmem:[%s161 + $0x4b] sm:$0xff] %v18
  %173 = vst [vmem:[%s161 + $0x53] sm:$0xff] %v19
  %174 = vst [vmem:[%s161 + $0x5b] sm:$0xff] %v20
  %175 = vst [vmem:[%s161 + $0x63] sm:$0xff] %v21
  %176 = vst [vmem:[%s161 + $0x6b] sm:$0xff] %v22
  %177 = vst [vmem:[%s161 + $0x73] sm:$0xff] %v23
  %178 = vst [vmem:[%s161 + $0x7b] sm:$0xff] %v24
  %179 = vst [vmem:[%s161 + $0x83] sm:$0xff] %v25
  %180 = vst [vmem:[%s161 + $0x8b] sm:$0xff] %v26
  %181 = vst [vmem:[%s161 + $0x93] sm:$0xff] %v27
  %182 = vst [vmem:[%s161 + $0x9b] sm:$0xff] %v28
  %183 = vst [vmem:[%s161 + $0xa3] sm:$0xff] %v29
  %184 = vst [vmem:[%s161 + $0xab] sm:$0xff] %v30
  %185 = vst [vmem:[%s161 + $0xb3] sm:$0xff] %v31
  %186 = vst [vmem:[%s161 + $0xbb] sm:$0x1f] %v32
  %s187 = scalar_lea.vmem [#allocation2], 1152
  %188 = vst [vmem:[%s187 - $0x6] sm:$0xc0] %v8
  %189 = vst [vmem:[%s187 + $0x2] sm:$0xff] %v9
  %190 = vst [vmem:[%s187 + $0xa] sm:$0xff] %v10
  %191 = vst [vmem:[%s187 + $0x12] sm:$0xff] %v11
  %192 = vst [vmem:[%s187 + $0x1a] sm:$0xff] %v12
  %193 = vst [vmem:[%s187 + $0x22] sm:$0xff] %v13
  %194 = vst [vmem:[%s187 + $0x2a] sm:$0xff] %v14
  %195 = vst [vmem:[%s187 + $0x32] sm:$0xff] %v15
  %196 = vst [vmem:[%s187 + $0x3a] sm:$0xff] %v16
  %197 = vst [vmem:[%s187 + $0x42] sm:$0xff] %v17
  %198 = vst [vmem:[%s187 + $0x4a] sm:$0xff] %v18
  %199 = vst [vmem:[%s187 + $0x52] sm:$0xff] %v19
  %200 = vst [vmem:[%s187 + $0x5a] sm:$0xff] %v20
  %201 = vst [vmem:[%s187 + $0x62] sm:$0xff] %v21
  %202 = vst [vmem:[%s187 + $0x6a] sm:$0xff] %v22
  %203 = vst [vmem:[%s187 + $0x72] sm:$0xff] %v23
  %204 = vst [vmem:[%s187 + $0x7a] sm:$0xff] %v24
  %205 = vst [vmem:[%s187 + $0x82] sm:$0xff] %v25
  %206 = vst [vmem:[%s187 + $0x8a] sm:$0xff] %v26
  %207 = vst [vmem:[%s187 + $0x92] sm:$0xff] %v27
  %208 = vst [vmem:[%s187 + $0x9a] sm:$0xff] %v28
  %209 = vst [vmem:[%s187 + $0xa2] sm:$0xff] %v29
  %210 = vst [vmem:[%s187 + $0xaa] sm:$0xff] %v30
  %211 = vst [vmem:[%s187 + $0xb2] sm:$0xff] %v31
  %212 = vst [vmem:[%s187 + $0xba] sm:$0x3f] %v32
  %s213 = scalar_lea.vmem [#allocation2], 1344
  %214 = vst [vmem:[%s213 - $0x7] sm:$0x80] %v8
  %215 = vst [vmem:[%s213 + $0x1] sm:$0xff] %v9
  %216 = vst [vmem:[%s213 + $0x9] sm:$0xff] %v10
  %217 = vst [vmem:[%s213 + $0x11] sm:$0xff] %v11
  %218 = vst [vmem:[%s213 + $0x19] sm:$0xff] %v12
  %219 = vst [vmem:[%s213 + $0x21] sm:$0xff] %v13
  %220 = vst [vmem:[%s213 + $0x29] sm:$0xff] %v14
  %221 = vst [vmem:[%s213 + $0x31] sm:$0xff] %v15
  %222 = vst [vmem:[%s213 + $0x39] sm:$0xff] %v16
  %223 = vst [vmem:[%s213 + $0x41] sm:$0xff] %v17
  %224 = vst [vmem:[%s213 + $0x49] sm:$0xff] %v18
  %225 = vst [vmem:[%s213 + $0x51] sm:$0xff] %v19
  %226 = vst [vmem:[%s213 + $0x59] sm:$0xff] %v20
  %227 = vst [vmem:[%s213 + $0x61] sm:$0xff] %v21
  %228 = vst [vmem:[%s213 + $0x69] sm:$0xff] %v22
  %229 = vst [vmem:[%s213 + $0x71] sm:$0xff] %v23
  %230 = vst [vmem:[%s213 + $0x79] sm:$0xff] %v24
  %231 = vst [vmem:[%s213 + $0x81] sm:$0xff] %v25
  %232 = vst [vmem:[%s213 + $0x89] sm:$0xff] %v26
  %233 = vst [vmem:[%s213 + $0x91] sm:$0xff] %v27
  %234 = vst [vmem:[%s213 + $0x99] sm:$0xff] %v28
  %235 = vst [vmem:[%s213 + $0xa1] sm:$0xff] %v29
  %236 = vst [vmem:[%s213 + $0xa9] sm:$0xff] %v30
  %237 = vst [vmem:[%s213 + $0xb1] sm:$0xff] %v31
  %238 = vst [vmem:[%s213 + $0xb9] sm:$0x7f] %v32
  loop: start=0, step=1, limit=9
  $region6: #{librosa_f0_estimate.1} parent=0 // loop_pre_header
    _
  $region7: #{librosa_f0_estimate.1} parent=0 // loop_header
    %s240 = sphi 0, %s244
    %p241 = scmp.ge.s32.totalorder %s240, 9
    %v245 = vphi 0.0, %v949
    %v246 = vphi 3e+38, %v965
    %v247 = vphi 16.0, %v966
  $region8: #{librosa_f0_estimate.1} parent=0 // loop_header_branch
    %243 = sbr.rel (%p241) target = $region12
  $region9: #{librosa_f0_estimate.1} parent=0 // loop_body
    %s248 = smul.u32 %s240, 8
    %s249 = scalar_lea.vmem [#allocation2], %s248
    %v250 = vld [vmem:[%s249] sm:$0xff]
    %v251 = vld [vmem:[%s249 + $0x8] sm:$0xff]
    %v252 = vld [vmem:[%s249 + $0x10] sm:$0xff]
    %v253 = vld [vmem:[%s249 + $0x18] sm:$0xff]
    %v254 = vld [vmem:[%s249 + $0x20] sm:$0xff]
    %v255 = vld [vmem:[%s249 + $0x28] sm:$0xff]
    %v256 = vld [vmem:[%s249 + $0x30] sm:$0xff]
    %v257 = vld [vmem:[%s249 + $0x38] sm:$0xff]
    %v258 = vld [vmem:[%s249 + $0x40] sm:$0xff]
    %v259 = vld [vmem:[%s249 + $0x48] sm:$0xff]
    %v260 = vld [vmem:[%s249 + $0x50] sm:$0xff]
    %v261 = vld [vmem:[%s249 + $0x58] sm:$0xff]
    %v262 = vld [vmem:[%s249 + $0x60] sm:$0xff]
    %v263 = vld [vmem:[%s249 + $0x68] sm:$0xff]
    %v264 = vld [vmem:[%s249 + $0x70] sm:$0xff]
    %v265 = vld [vmem:[%s249 + $0x78] sm:$0xff]
    %v266 = vsub.f32 %v8, %v250
    %v267 = vsub.f32 %v9, %v251
    %v268 = vsub.f32 %v10, %v252
    %v269 = vsub.f32 %v11, %v253
    %v270 = vsub.f32 %v12, %v254
    %v271 = vsub.f32 %v13, %v255
    %v272 = vsub.f32 %v14, %v256
    %v273 = vsub.f32 %v15, %v257
    %v274 = vsub.f32 %v16, %v258
    %v275 = vsub.f32 %v17, %v259
    %v276 = vsub.f32 %v18, %v260
    %v277 = vsub.f32 %v19, %v261
    %v278 = vsub.f32 %v20, %v262
    %v279 = vsub.f32 %v21, %v263
    %v280 = vsub.f32 %v22, %v264
    %v281 = vsub.f32 %v23, %v265
    %v282 = vmul.f32 %v266, %v266
    %v283 = vmul.f32 %v267, %v267
    %v284 = vmul.f32 %v268, %v268
    %v285 = vmul.f32 %v269, %v269
    %v286 = vmul.f32 %v270, %v270
    %v287 = vmul.f32 %v271, %v271
    %v288 = vmul.f32 %v272, %v272
    %v289 = vmul.f32 %v273, %v273
    %v290 = vmul.f32 %v274, %v274
    %v291 = vmul.f32 %v275, %v275
    %v292 = vmul.f32 %v276, %v276
    %v293 = vmul.f32 %v277, %v277
    %v294 = vmul.f32 %v278, %v278
    %v295 = vmul.f32 %v279, %v279
    %v296 = vmul.f32 %v280, %v280
    %v297 = vmul.f32 %v281, %v281
    %v298 = vadd.f32 %v282, %v283
    %v299 = vadd.f32 %v298, %v284
    %v300 = vadd.f32 %v299, %v285
    %v301 = vadd.f32 %v300, %v286
    %v302 = vadd.f32 %v301, %v287
    %v303 = vadd.f32 %v302, %v288
    %v304 = vadd.f32 %v303, %v289
    %v305 = vadd.f32 %v304, %v290
    %v306 = vadd.f32 %v305, %v291
    %v307 = vadd.f32 %v306, %v292
    %v308 = vadd.f32 %v307, %v293
    %v309 = vadd.f32 %v308, %v294
    %v310 = vadd.f32 %v309, %v295
    %v311 = vadd.f32 %v310, %v296
    %v312 = vadd.f32 %v311, %v297
    %v313 = vrot.slane %v312, 4
    %v314 = vadd.f32 %v312, %v313
    %v315 = vrot.slane %v314, 2
    %v316 = vadd.f32 %v314, %v315
    %v317 = vrot.slane %v316, 1
    %v318 = vadd.f32 %v316, %v317
    %v319 = vadd.f32 %v245, %v318
    %s320 = scvt.s32.f32 %s248
    %v321 = vmax.f32 %v319, 1e-12
    %v322 = vrcp.pop %v321
    %v323 = vstv %s320
    %v324 = vmul.f32 %v318, %v323
    %v325 = vmul.f32 %v324, %v322
    %p326 = scmp.ge.s32.totalorder %s248, 16
    %p327 = scmp.le.s32.totalorder %s248, 64
    %p328 = pnand %p326, %p327
    %p329 = pneg %p328
    %vm330 = vcmp.lt.f32.partialorder %v325, %v246
    %s331 = scalar_select %p329, 1, 0
    %v332 = vstv %s331
    %vm333 = vcmp.eq.s32.totalorder %v332, 1
    %vm334 = vmand %vm333, %vm330
    %v335 = vsel %vm334, %v325, %v246
    %v336 = vsel %vm334, %v323, %v247
    %s337 = sadd.s32 %s248, 1
    %s338 = sadd.s32 %s248, 192
    %s339 = scalar_lea.vmem [#allocation2], %s338
    %v340 = vld [vmem:[%s339] sm:$0xff]
    %v341 = vld [vmem:[%s339 + $0x8] sm:$0xff]
    %v342 = vld [vmem:[%s339 + $0x10] sm:$0xff]
    %v343 = vld [vmem:[%s339 + $0x18] sm:$0xff]
    %v344 = vld [vmem:[%s339 + $0x20] sm:$0xff]
    %v345 = vld [vmem:[%s339 + $0x28] sm:$0xff]
    %v346 = vld [vmem:[%s339 + $0x30] sm:$0xff]
    %v347 = vld [vmem:[%s339 + $0x38] sm:$0xff]
    %v348 = vld [vmem:[%s339 + $0x40] sm:$0xff]
    %v349 = vld [vmem:[%s339 + $0x48] sm:$0xff]
    %v350 = vld [vmem:[%s339 + $0x50] sm:$0xff]
    %v351 = vld [vmem:[%s339 + $0x58] sm:$0xff]
    %v352 = vld [vmem:[%s339 + $0x60] sm:$0xff]
    %v353 = vld [vmem:[%s339 + $0x68] sm:$0xff]
    %v354 = vld [vmem:[%s339 + $0x70] sm:$0xff]
    %v355 = vld [vmem:[%s339 + $0x78] sm:$0xff]
    %v356 = vsub.f32 %v8, %v340
    %v357 = vsub.f32 %v9, %v341
    %v358 = vsub.f32 %v10, %v342
    %v359 = vsub.f32 %v11, %v343
    %v360 = vsub.f32 %v12, %v344
    %v361 = vsub.f32 %v13, %v345
    %v362 = vsub.f32 %v14, %v346
    %v363 = vsub.f32 %v15, %v347
    %v364 = vsub.f32 %v16, %v348
    %v365 = vsub.f32 %v17, %v349
    %v366 = vsub.f32 %v18, %v350
    %v367 = vsub.f32 %v19, %v351
    %v368 = vsub.f32 %v20, %v352
    %v369 = vsub.f32 %v21, %v353
    %v370 = vsub.f32 %v22, %v354
    %v371 = vsub.f32 %v23, %v355
    %v372 = vmul.f32 %v356, %v356
    %v373 = vmul.f32 %v357, %v357
    %v374 = vmul.f32 %v358, %v358
    %v375 = vmul.f32 %v359, %v359
    %v376 = vmul.f32 %v360, %v360
    %v377 = vmul.f32 %v361, %v361
    %v378 = vmul.f32 %v362, %v362
    %v379 = vmul.f32 %v363, %v363
    %v380 = vmul.f32 %v364, %v364
    %v381 = vmul.f32 %v365, %v365
    %v382 = vmul.f32 %v366, %v366
    %v383 = vmul.f32 %v367, %v367
    %v384 = vmul.f32 %v368, %v368
    %v385 = vmul.f32 %v369, %v369
    %v386 = vmul.f32 %v370, %v370
    %v387 = vmul.f32 %v371, %v371
    %v388 = vadd.f32 %v372, %v373
    %v389 = vadd.f32 %v388, %v374
    %v390 = vadd.f32 %v389, %v375
    %v391 = vadd.f32 %v390, %v376
    %v392 = vadd.f32 %v391, %v377
    %v393 = vadd.f32 %v392, %v378
    %v394 = vadd.f32 %v393, %v379
    %v395 = vadd.f32 %v394, %v380
    %v396 = vadd.f32 %v395, %v381
    %v397 = vadd.f32 %v396, %v382
    %v398 = vadd.f32 %v397, %v383
    %v399 = vadd.f32 %v398, %v384
    %v400 = vadd.f32 %v399, %v385
    %v401 = vadd.f32 %v400, %v386
    %v402 = vadd.f32 %v401, %v387
    %v403 = vrot.slane %v402, 4
    %v404 = vadd.f32 %v402, %v403
    %v405 = vrot.slane %v404, 2
    %v406 = vadd.f32 %v404, %v405
    %v407 = vrot.slane %v406, 1
    %v408 = vadd.f32 %v406, %v407
    %v409 = vadd.f32 %v319, %v408
    %s410 = scvt.s32.f32 %s337
    %v411 = vmax.f32 %v409, 1e-12
    %v412 = vrcp.pop %v411
    %v413 = vstv %s410
    %v414 = vmul.f32 %v408, %v413
    %v415 = vmul.f32 %v414, %v412
    %p416 = scmp.ge.s32.totalorder %s337, 16
    %p417 = scmp.le.s32.totalorder %s337, 64
    %p418 = pnand %p416, %p417
    %p419 = pneg %p418
    %vm420 = vcmp.lt.f32.partialorder %v415, %v335
    %s421 = scalar_select %p419, 1, 0
    %v422 = vstv %s421
    %vm423 = vcmp.eq.s32.totalorder %v422, 1
    %vm424 = vmand %vm423, %vm420
    %v425 = vsel %vm424, %v415, %v335
    %v426 = vsel %vm424, %v413, %v336
    %s427 = sadd.s32 %s248, 2
    %s428 = sadd.s32 %s248, 384
    %s429 = scalar_lea.vmem [#allocation2], %s428
    %v430 = vld [vmem:[%s429] sm:$0xff]
    %v431 = vld [vmem:[%s429 + $0x8] sm:$0xff]
    %v432 = vld [vmem:[%s429 + $0x10] sm:$0xff]
    %v433 = vld [vmem:[%s429 + $0x18] sm:$0xff]
    %v434 = vld [vmem:[%s429 + $0x20] sm:$0xff]
    %v435 = vld [vmem:[%s429 + $0x28] sm:$0xff]
    %v436 = vld [vmem:[%s429 + $0x30] sm:$0xff]
    %v437 = vld [vmem:[%s429 + $0x38] sm:$0xff]
    %v438 = vld [vmem:[%s429 + $0x40] sm:$0xff]
    %v439 = vld [vmem:[%s429 + $0x48] sm:$0xff]
    %v440 = vld [vmem:[%s429 + $0x50] sm:$0xff]
    %v441 = vld [vmem:[%s429 + $0x58] sm:$0xff]
    %v442 = vld [vmem:[%s429 + $0x60] sm:$0xff]
    %v443 = vld [vmem:[%s429 + $0x68] sm:$0xff]
    %v444 = vld [vmem:[%s429 + $0x70] sm:$0xff]
    %v445 = vld [vmem:[%s429 + $0x78] sm:$0xff]
    %v446 = vsub.f32 %v8, %v430
    %v447 = vsub.f32 %v9, %v431
    %v448 = vsub.f32 %v10, %v432
    %v449 = vsub.f32 %v11, %v433
    %v450 = vsub.f32 %v12, %v434
    %v451 = vsub.f32 %v13, %v435
    %v452 = vsub.f32 %v14, %v436
    %v453 = vsub.f32 %v15, %v437
    %v454 = vsub.f32 %v16, %v438
    %v455 = vsub.f32 %v17, %v439
    %v456 = vsub.f32 %v18, %v440
    %v457 = vsub.f32 %v19, %v441
    %v458 = vsub.f32 %v20, %v442
    %v459 = vsub.f32 %v21, %v443
    %v460 = vsub.f32 %v22, %v444
    %v461 = vsub.f32 %v23, %v445
    %v462 = vmul.f32 %v446, %v446
    %v463 = vmul.f32 %v447, %v447
    %v464 = vmul.f32 %v448, %v448
    %v465 = vmul.f32 %v449, %v449
    %v466 = vmul.f32 %v450, %v450
    %v467 = vmul.f32 %v451, %v451
    %v468 = vmul.f32 %v452, %v452
    %v469 = vmul.f32 %v453, %v453
    %v470 = vmul.f32 %v454, %v454
    %v471 = vmul.f32 %v455, %v455
    %v472 = vmul.f32 %v456, %v456
    %v473 = vmul.f32 %v457, %v457
    %v474 = vmul.f32 %v458, %v458
    %v475 = vmul.f32 %v459, %v459
    %v476 = vmul.f32 %v460, %v460
    %v477 = vmul.f32 %v461, %v461
    %v478 = vadd.f32 %v462, %v463
    %v479 = vadd.f32 %v478, %v464
    %v480 = vadd.f32 %v479, %v465
    %v481 = vadd.f32 %v480, %v466
    %v482 = vadd.f32 %v481, %v467
    %v483 = vadd.f32 %v482, %v468
    %v484 = vadd.f32 %v483, %v469
    %v485 = vadd.f32 %v484, %v470
    %v486 = vadd.f32 %v485, %v471
    %v487 = vadd.f32 %v486, %v472
    %v488 = vadd.f32 %v487, %v473
    %v489 = vadd.f32 %v488, %v474
    %v490 = vadd.f32 %v489, %v475
    %v491 = vadd.f32 %v490, %v476
    %v492 = vadd.f32 %v491, %v477
    %v493 = vrot.slane %v492, 4
    %v494 = vadd.f32 %v492, %v493
    %v495 = vrot.slane %v494, 2
    %v496 = vadd.f32 %v494, %v495
    %v497 = vrot.slane %v496, 1
    %v498 = vadd.f32 %v496, %v497
    %v499 = vadd.f32 %v409, %v498
    %s500 = scvt.s32.f32 %s427
    %v501 = vmax.f32 %v499, 1e-12
    %v502 = vrcp.pop %v501
    %v503 = vstv %s500
    %v504 = vmul.f32 %v498, %v503
    %v505 = vmul.f32 %v504, %v502
    %p506 = scmp.ge.s32.totalorder %s427, 16
    %p507 = scmp.le.s32.totalorder %s427, 64
    %p508 = pnand %p506, %p507
    %p509 = pneg %p508
    %vm510 = vcmp.lt.f32.partialorder %v505, %v425
    %s511 = scalar_select %p509, 1, 0
    %v512 = vstv %s511
    %vm513 = vcmp.eq.s32.totalorder %v512, 1
    %vm514 = vmand %vm513, %vm510
    %v515 = vsel %vm514, %v505, %v425
    %v516 = vsel %vm514, %v503, %v426
    %s517 = sadd.s32 %s248, 3
    %s518 = sadd.s32 %s248, 576
    %s519 = scalar_lea.vmem [#allocation2], %s518
    %v520 = vld [vmem:[%s519] sm:$0xff]
    %v521 = vld [vmem:[%s519 + $0x8] sm:$0xff]
    %v522 = vld [vmem:[%s519 + $0x10] sm:$0xff]
    %v523 = vld [vmem:[%s519 + $0x18] sm:$0xff]
    %v524 = vld [vmem:[%s519 + $0x20] sm:$0xff]
    %v525 = vld [vmem:[%s519 + $0x28] sm:$0xff]
    %v526 = vld [vmem:[%s519 + $0x30] sm:$0xff]
    %v527 = vld [vmem:[%s519 + $0x38] sm:$0xff]
    %v528 = vld [vmem:[%s519 + $0x40] sm:$0xff]
    %v529 = vld [vmem:[%s519 + $0x48] sm:$0xff]
    %v530 = vld [vmem:[%s519 + $0x50] sm:$0xff]
    %v531 = vld [vmem:[%s519 + $0x58] sm:$0xff]
    %v532 = vld [vmem:[%s519 + $0x60] sm:$0xff]
    %v533 = vld [vmem:[%s519 + $0x68] sm:$0xff]
    %v534 = vld [vmem:[%s519 + $0x70] sm:$0xff]
    %v535 = vld [vmem:[%s519 + $0x78] sm:$0xff]
    %v536 = vsub.f32 %v8, %v520
    %v537 = vsub.f32 %v9, %v521
    %v538 = vsub.f32 %v10, %v522
    %v539 = vsub.f32 %v11, %v523
    %v540 = vsub.f32 %v12, %v524
    %v541 = vsub.f32 %v13, %v525
    %v542 = vsub.f32 %v14, %v526
    %v543 = vsub.f32 %v15, %v527
    %v544 = vsub.f32 %v16, %v528
    %v545 = vsub.f32 %v17, %v529
    %v546 = vsub.f32 %v18, %v530
    %v547 = vsub.f32 %v19, %v531
    %v548 = vsub.f32 %v20, %v532
    %v549 = vsub.f32 %v21, %v533
    %v550 = vsub.f32 %v22, %v534
    %v551 = vsub.f32 %v23, %v535
    %v552 = vmul.f32 %v536, %v536
    %v553 = vmul.f32 %v537, %v537
    %v554 = vmul.f32 %v538, %v538
    %v555 = vmul.f32 %v539, %v539
    %v556 = vmul.f32 %v540, %v540
    %v557 = vmul.f32 %v541, %v541
    %v558 = vmul.f32 %v542, %v542
    %v559 = vmul.f32 %v543, %v543
    %v560 = vmul.f32 %v544, %v544
    %v561 = vmul.f32 %v545, %v545
    %v562 = vmul.f32 %v546, %v546
    %v563 = vmul.f32 %v547, %v547
    %v564 = vmul.f32 %v548, %v548
    %v565 = vmul.f32 %v549, %v549
    %v566 = vmul.f32 %v550, %v550
    %v567 = vmul.f32 %v551, %v551
    %v568 = vadd.f32 %v552, %v553
    %v569 = vadd.f32 %v568, %v554
    %v570 = vadd.f32 %v569, %v555
    %v571 = vadd.f32 %v570, %v556
    %v572 = vadd.f32 %v571, %v557
    %v573 = vadd.f32 %v572, %v558
    %v574 = vadd.f32 %v573, %v559
    %v575 = vadd.f32 %v574, %v560
    %v576 = vadd.f32 %v575, %v561
    %v577 = vadd.f32 %v576, %v562
    %v578 = vadd.f32 %v577, %v563
    %v579 = vadd.f32 %v578, %v564
    %v580 = vadd.f32 %v579, %v565
    %v581 = vadd.f32 %v580, %v566
    %v582 = vadd.f32 %v581, %v567
    %v583 = vrot.slane %v582, 4
    %v584 = vadd.f32 %v582, %v583
    %v585 = vrot.slane %v584, 2
    %v586 = vadd.f32 %v584, %v585
    %v587 = vrot.slane %v586, 1
    %v588 = vadd.f32 %v586, %v587
    %v589 = vadd.f32 %v499, %v588
    %s590 = scvt.s32.f32 %s517
    %v591 = vmax.f32 %v589, 1e-12
    %v592 = vrcp.pop %v591
    %v593 = vstv %s590
    %v594 = vmul.f32 %v588, %v593
    %v595 = vmul.f32 %v594, %v592
    %p596 = scmp.ge.s32.totalorder %s517, 16
    %p597 = scmp.le.s32.totalorder %s517, 64
    %p598 = pnand %p596, %p597
    %p599 = pneg %p598
    %vm600 = vcmp.lt.f32.partialorder %v595, %v515
    %s601 = scalar_select %p599, 1, 0
    %v602 = vstv %s601
    %vm603 = vcmp.eq.s32.totalorder %v602, 1
    %vm604 = vmand %vm603, %vm600
    %v605 = vsel %vm604, %v595, %v515
    %v606 = vsel %vm604, %v593, %v516
    %s607 = sadd.s32 %s248, 4
    %s608 = sadd.s32 %s248, 768
    %s609 = scalar_lea.vmem [#allocation2], %s608
    %v610 = vld [vmem:[%s609] sm:$0xff]
    %v611 = vld [vmem:[%s609 + $0x8] sm:$0xff]
    %v612 = vld [vmem:[%s609 + $0x10] sm:$0xff]
    %v613 = vld [vmem:[%s609 + $0x18] sm:$0xff]
    %v614 = vld [vmem:[%s609 + $0x20] sm:$0xff]
    %v615 = vld [vmem:[%s609 + $0x28] sm:$0xff]
    %v616 = vld [vmem:[%s609 + $0x30] sm:$0xff]
    %v617 = vld [vmem:[%s609 + $0x38] sm:$0xff]
    %v618 = vld [vmem:[%s609 + $0x40] sm:$0xff]
    %v619 = vld [vmem:[%s609 + $0x48] sm:$0xff]
    %v620 = vld [vmem:[%s609 + $0x50] sm:$0xff]
    %v621 = vld [vmem:[%s609 + $0x58] sm:$0xff]
    %v622 = vld [vmem:[%s609 + $0x60] sm:$0xff]
    %v623 = vld [vmem:[%s609 + $0x68] sm:$0xff]
    %v624 = vld [vmem:[%s609 + $0x70] sm:$0xff]
    %v625 = vld [vmem:[%s609 + $0x78] sm:$0xff]
    %v626 = vsub.f32 %v8, %v610
    %v627 = vsub.f32 %v9, %v611
    %v628 = vsub.f32 %v10, %v612
    %v629 = vsub.f32 %v11, %v613
    %v630 = vsub.f32 %v12, %v614
    %v631 = vsub.f32 %v13, %v615
    %v632 = vsub.f32 %v14, %v616
    %v633 = vsub.f32 %v15, %v617
    %v634 = vsub.f32 %v16, %v618
    %v635 = vsub.f32 %v17, %v619
    %v636 = vsub.f32 %v18, %v620
    %v637 = vsub.f32 %v19, %v621
    %v638 = vsub.f32 %v20, %v622
    %v639 = vsub.f32 %v21, %v623
    %v640 = vsub.f32 %v22, %v624
    %v641 = vsub.f32 %v23, %v625
    %v642 = vmul.f32 %v626, %v626
    %v643 = vmul.f32 %v627, %v627
    %v644 = vmul.f32 %v628, %v628
    %v645 = vmul.f32 %v629, %v629
    %v646 = vmul.f32 %v630, %v630
    %v647 = vmul.f32 %v631, %v631
    %v648 = vmul.f32 %v632, %v632
    %v649 = vmul.f32 %v633, %v633
    %v650 = vmul.f32 %v634, %v634
    %v651 = vmul.f32 %v635, %v635
    %v652 = vmul.f32 %v636, %v636
    %v653 = vmul.f32 %v637, %v637
    %v654 = vmul.f32 %v638, %v638
    %v655 = vmul.f32 %v639, %v639
    %v656 = vmul.f32 %v640, %v640
    %v657 = vmul.f32 %v641, %v641
    %v658 = vadd.f32 %v642, %v643
    %v659 = vadd.f32 %v658, %v644
    %v660 = vadd.f32 %v659, %v645
    %v661 = vadd.f32 %v660, %v646
    %v662 = vadd.f32 %v661, %v647
    %v663 = vadd.f32 %v662, %v648
    %v664 = vadd.f32 %v663, %v649
    %v665 = vadd.f32 %v664, %v650
    %v666 = vadd.f32 %v665, %v651
    %v667 = vadd.f32 %v666, %v652
    %v668 = vadd.f32 %v667, %v653
    %v669 = vadd.f32 %v668, %v654
    %v670 = vadd.f32 %v669, %v655
    %v671 = vadd.f32 %v670, %v656
    %v672 = vadd.f32 %v671, %v657
    %v673 = vrot.slane %v672, 4
    %v674 = vadd.f32 %v672, %v673
    %v675 = vrot.slane %v674, 2
    %v676 = vadd.f32 %v674, %v675
    %v677 = vrot.slane %v676, 1
    %v678 = vadd.f32 %v676, %v677
    %v679 = vadd.f32 %v589, %v678
    %s680 = scvt.s32.f32 %s607
    %v681 = vmax.f32 %v679, 1e-12
    %v682 = vrcp.pop %v681
    %v683 = vstv %s680
    %v684 = vmul.f32 %v678, %v683
    %v685 = vmul.f32 %v684, %v682
    %p686 = scmp.ge.s32.totalorder %s607, 16
    %p687 = scmp.le.s32.totalorder %s607, 64
    %p688 = pnand %p686, %p687
    %p689 = pneg %p688
    %vm690 = vcmp.lt.f32.partialorder %v685, %v605
    %s691 = scalar_select %p689, 1, 0
    %v692 = vstv %s691
    %vm693 = vcmp.eq.s32.totalorder %v692, 1
    %vm694 = vmand %vm693, %vm690
    %v695 = vsel %vm694, %v685, %v605
    %v696 = vsel %vm694, %v683, %v606
    %s697 = sadd.s32 %s248, 5
    %s698 = sadd.s32 %s248, 960
    %s699 = scalar_lea.vmem [#allocation2], %s698
    %v700 = vld [vmem:[%s699] sm:$0xff]
    %v701 = vld [vmem:[%s699 + $0x8] sm:$0xff]
    %v702 = vld [vmem:[%s699 + $0x10] sm:$0xff]
    %v703 = vld [vmem:[%s699 + $0x18] sm:$0xff]
    %v704 = vld [vmem:[%s699 + $0x20] sm:$0xff]
    %v705 = vld [vmem:[%s699 + $0x28] sm:$0xff]
    %v706 = vld [vmem:[%s699 + $0x30] sm:$0xff]
    %v707 = vld [vmem:[%s699 + $0x38] sm:$0xff]
    %v708 = vld [vmem:[%s699 + $0x40] sm:$0xff]
    %v709 = vld [vmem:[%s699 + $0x48] sm:$0xff]
    %v710 = vld [vmem:[%s699 + $0x50] sm:$0xff]
    %v711 = vld [vmem:[%s699 + $0x58] sm:$0xff]
    %v712 = vld [vmem:[%s699 + $0x60] sm:$0xff]
    %v713 = vld [vmem:[%s699 + $0x68] sm:$0xff]
    %v714 = vld [vmem:[%s699 + $0x70] sm:$0xff]
    %v715 = vld [vmem:[%s699 + $0x78] sm:$0xff]
    %v716 = vsub.f32 %v8, %v700
    %v717 = vsub.f32 %v9, %v701
    %v718 = vsub.f32 %v10, %v702
    %v719 = vsub.f32 %v11, %v703
    %v720 = vsub.f32 %v12, %v704
    %v721 = vsub.f32 %v13, %v705
    %v722 = vsub.f32 %v14, %v706
    %v723 = vsub.f32 %v15, %v707
    %v724 = vsub.f32 %v16, %v708
    %v725 = vsub.f32 %v17, %v709
    %v726 = vsub.f32 %v18, %v710
    %v727 = vsub.f32 %v19, %v711
    %v728 = vsub.f32 %v20, %v712
    %v729 = vsub.f32 %v21, %v713
    %v730 = vsub.f32 %v22, %v714
    %v731 = vsub.f32 %v23, %v715
    %v732 = vmul.f32 %v716, %v716
    %v733 = vmul.f32 %v717, %v717
    %v734 = vmul.f32 %v718, %v718
    %v735 = vmul.f32 %v719, %v719
    %v736 = vmul.f32 %v720, %v720
    %v737 = vmul.f32 %v721, %v721
    %v738 = vmul.f32 %v722, %v722
    %v739 = vmul.f32 %v723, %v723
    %v740 = vmul.f32 %v724, %v724
    %v741 = vmul.f32 %v725, %v725
    %v742 = vmul.f32 %v726, %v726
    %v743 = vmul.f32 %v727, %v727
    %v744 = vmul.f32 %v728, %v728
    %v745 = vmul.f32 %v729, %v729
    %v746 = vmul.f32 %v730, %v730
    %v747 = vmul.f32 %v731, %v731
    %v748 = vadd.f32 %v732, %v733
    %v749 = vadd.f32 %v748, %v734
    %v750 = vadd.f32 %v749, %v735
    %v751 = vadd.f32 %v750, %v736
    %v752 = vadd.f32 %v751, %v737
    %v753 = vadd.f32 %v752, %v738
    %v754 = vadd.f32 %v753, %v739
    %v755 = vadd.f32 %v754, %v740
    %v756 = vadd.f32 %v755, %v741
    %v757 = vadd.f32 %v756, %v742
    %v758 = vadd.f32 %v757, %v743
    %v759 = vadd.f32 %v758, %v744
    %v760 = vadd.f32 %v759, %v745
    %v761 = vadd.f32 %v760, %v746
    %v762 = vadd.f32 %v761, %v747
    %v763 = vrot.slane %v762, 4
    %v764 = vadd.f32 %v762, %v763
    %v765 = vrot.slane %v764, 2
    %v766 = vadd.f32 %v764, %v765
    %v767 = vrot.slane %v766, 1
    %v768 = vadd.f32 %v766, %v767
    %v769 = vadd.f32 %v679, %v768
    %s770 = scvt.s32.f32 %s697
    %v771 = vmax.f32 %v769, 1e-12
    %v772 = vrcp.pop %v771
    %v773 = vstv %s770
    %v774 = vmul.f32 %v768, %v773
    %v775 = vmul.f32 %v774, %v772
    %p776 = scmp.ge.s32.totalorder %s697, 16
    %p777 = scmp.le.s32.totalorder %s697, 64
    %p778 = pnand %p776, %p777
    %p779 = pneg %p778
    %vm780 = vcmp.lt.f32.partialorder %v775, %v695
    %s781 = scalar_select %p779, 1, 0
    %v782 = vstv %s781
    %vm783 = vcmp.eq.s32.totalorder %v782, 1
    %vm784 = vmand %vm783, %vm780
    %v785 = vsel %vm784, %v775, %v695
    %v786 = vsel %vm784, %v773, %v696
    %s787 = sadd.s32 %s248, 6
    %s788 = sadd.s32 %s248, 1152
    %s789 = scalar_lea.vmem [#allocation2], %s788
    %v790 = vld [vmem:[%s789] sm:$0xff]
    %v791 = vld [vmem:[%s789 + $0x8] sm:$0xff]
    %v792 = vld [vmem:[%s789 + $0x10] sm:$0xff]
    %v793 = vld [vmem:[%s789 + $0x18] sm:$0xff]
    %v794 = vld [vmem:[%s789 + $0x20] sm:$0xff]
    %v795 = vld [vmem:[%s789 + $0x28] sm:$0xff]
    %v796 = vld [vmem:[%s789 + $0x30] sm:$0xff]
    %v797 = vld [vmem:[%s789 + $0x38] sm:$0xff]
    %v798 = vld [vmem:[%s789 + $0x40] sm:$0xff]
    %v799 = vld [vmem:[%s789 + $0x48] sm:$0xff]
    %v800 = vld [vmem:[%s789 + $0x50] sm:$0xff]
    %v801 = vld [vmem:[%s789 + $0x58] sm:$0xff]
    %v802 = vld [vmem:[%s789 + $0x60] sm:$0xff]
    %v803 = vld [vmem:[%s789 + $0x68] sm:$0xff]
    %v804 = vld [vmem:[%s789 + $0x70] sm:$0xff]
    %v805 = vld [vmem:[%s789 + $0x78] sm:$0xff]
    %v806 = vsub.f32 %v8, %v790
    %v807 = vsub.f32 %v9, %v791
    %v808 = vsub.f32 %v10, %v792
    %v809 = vsub.f32 %v11, %v793
    %v810 = vsub.f32 %v12, %v794
    %v811 = vsub.f32 %v13, %v795
    %v812 = vsub.f32 %v14, %v796
    %v813 = vsub.f32 %v15, %v797
    %v814 = vsub.f32 %v16, %v798
    %v815 = vsub.f32 %v17, %v799
    %v816 = vsub.f32 %v18, %v800
    %v817 = vsub.f32 %v19, %v801
    %v818 = vsub.f32 %v20, %v802
    %v819 = vsub.f32 %v21, %v803
    %v820 = vsub.f32 %v22, %v804
    %v821 = vsub.f32 %v23, %v805
    %v822 = vmul.f32 %v806, %v806
    %v823 = vmul.f32 %v807, %v807
    %v824 = vmul.f32 %v808, %v808
    %v825 = vmul.f32 %v809, %v809
    %v826 = vmul.f32 %v810, %v810
    %v827 = vmul.f32 %v811, %v811
    %v828 = vmul.f32 %v812, %v812
    %v829 = vmul.f32 %v813, %v813
    %v830 = vmul.f32 %v814, %v814
    %v831 = vmul.f32 %v815, %v815
    %v832 = vmul.f32 %v816, %v816
    %v833 = vmul.f32 %v817, %v817
    %v834 = vmul.f32 %v818, %v818
    %v835 = vmul.f32 %v819, %v819
    %v836 = vmul.f32 %v820, %v820
    %v837 = vmul.f32 %v821, %v821
    %v838 = vadd.f32 %v822, %v823
    %v839 = vadd.f32 %v838, %v824
    %v840 = vadd.f32 %v839, %v825
    %v841 = vadd.f32 %v840, %v826
    %v842 = vadd.f32 %v841, %v827
    %v843 = vadd.f32 %v842, %v828
    %v844 = vadd.f32 %v843, %v829
    %v845 = vadd.f32 %v844, %v830
    %v846 = vadd.f32 %v845, %v831
    %v847 = vadd.f32 %v846, %v832
    %v848 = vadd.f32 %v847, %v833
    %v849 = vadd.f32 %v848, %v834
    %v850 = vadd.f32 %v849, %v835
    %v851 = vadd.f32 %v850, %v836
    %v852 = vadd.f32 %v851, %v837
    %v853 = vrot.slane %v852, 4
    %v854 = vadd.f32 %v852, %v853
    %v855 = vrot.slane %v854, 2
    %v856 = vadd.f32 %v854, %v855
    %v857 = vrot.slane %v856, 1
    %v858 = vadd.f32 %v856, %v857
    %v859 = vadd.f32 %v769, %v858
    %s860 = scvt.s32.f32 %s787
    %v861 = vmax.f32 %v859, 1e-12
    %v862 = vrcp.pop %v861
    %v863 = vstv %s860
    %v864 = vmul.f32 %v858, %v863
    %v865 = vmul.f32 %v864, %v862
    %p866 = scmp.ge.s32.totalorder %s787, 16
    %p867 = scmp.le.s32.totalorder %s787, 64
    %p868 = pnand %p866, %p867
    %p869 = pneg %p868
    %vm870 = vcmp.lt.f32.partialorder %v865, %v785
    %s871 = scalar_select %p869, 1, 0
    %v872 = vstv %s871
    %vm873 = vcmp.eq.s32.totalorder %v872, 1
    %vm874 = vmand %vm873, %vm870
    %v875 = vsel %vm874, %v865, %v785
    %v876 = vsel %vm874, %v863, %v786
    %s877 = sadd.s32 %s248, 7
    %s878 = sadd.s32 %s248, 1344
    %s879 = scalar_lea.vmem [#allocation2], %s878
    %v880 = vld [vmem:[%s879] sm:$0xff]
    %v881 = vld [vmem:[%s879 + $0x8] sm:$0xff]
    %v882 = vld [vmem:[%s879 + $0x10] sm:$0xff]
    %v883 = vld [vmem:[%s879 + $0x18] sm:$0xff]
    %v884 = vld [vmem:[%s879 + $0x20] sm:$0xff]
    %v885 = vld [vmem:[%s879 + $0x28] sm:$0xff]
    %v886 = vld [vmem:[%s879 + $0x30] sm:$0xff]
    %v887 = vld [vmem:[%s879 + $0x38] sm:$0xff]
    %v888 = vld [vmem:[%s879 + $0x40] sm:$0xff]
    %v889 = vld [vmem:[%s879 + $0x48] sm:$0xff]
    %v890 = vld [vmem:[%s879 + $0x50] sm:$0xff]
    %v891 = vld [vmem:[%s879 + $0x58] sm:$0xff]
    %v892 = vld [vmem:[%s879 + $0x60] sm:$0xff]
    %v893 = vld [vmem:[%s879 + $0x68] sm:$0xff]
    %v894 = vld [vmem:[%s879 + $0x70] sm:$0xff]
    %v895 = vld [vmem:[%s879 + $0x78] sm:$0xff]
    %v896 = vsub.f32 %v8, %v880
    %v897 = vsub.f32 %v9, %v881
    %v898 = vsub.f32 %v10, %v882
    %v899 = vsub.f32 %v11, %v883
    %v900 = vsub.f32 %v12, %v884
    %v901 = vsub.f32 %v13, %v885
    %v902 = vsub.f32 %v14, %v886
    %v903 = vsub.f32 %v15, %v887
    %v904 = vsub.f32 %v16, %v888
    %v905 = vsub.f32 %v17, %v889
    %v906 = vsub.f32 %v18, %v890
    %v907 = vsub.f32 %v19, %v891
    %v908 = vsub.f32 %v20, %v892
    %v909 = vsub.f32 %v21, %v893
    %v910 = vsub.f32 %v22, %v894
    %v911 = vsub.f32 %v23, %v895
    %v912 = vmul.f32 %v896, %v896
    %v913 = vmul.f32 %v897, %v897
    %v914 = vmul.f32 %v898, %v898
    %v915 = vmul.f32 %v899, %v899
    %v916 = vmul.f32 %v900, %v900
    %v917 = vmul.f32 %v901, %v901
    %v918 = vmul.f32 %v902, %v902
    %v919 = vmul.f32 %v903, %v903
    %v920 = vmul.f32 %v904, %v904
    %v921 = vmul.f32 %v905, %v905
    %v922 = vmul.f32 %v906, %v906
    %v923 = vmul.f32 %v907, %v907
    %v924 = vmul.f32 %v908, %v908
    %v925 = vmul.f32 %v909, %v909
    %v926 = vmul.f32 %v910, %v910
    %v927 = vmul.f32 %v911, %v911
    %v928 = vadd.f32 %v912, %v913
    %v929 = vadd.f32 %v928, %v914
    %v930 = vadd.f32 %v929, %v915
    %v931 = vadd.f32 %v930, %v916
    %v932 = vadd.f32 %v931, %v917
    %v933 = vadd.f32 %v932, %v918
    %v934 = vadd.f32 %v933, %v919
    %v935 = vadd.f32 %v934, %v920
    %v936 = vadd.f32 %v935, %v921
    %v937 = vadd.f32 %v936, %v922
    %v938 = vadd.f32 %v937, %v923
    %v939 = vadd.f32 %v938, %v924
    %v940 = vadd.f32 %v939, %v925
    %v941 = vadd.f32 %v940, %v926
    %v942 = vadd.f32 %v941, %v927
    %v943 = vrot.slane %v942, 4
    %v944 = vadd.f32 %v942, %v943
    %v945 = vrot.slane %v944, 2
    %v946 = vadd.f32 %v944, %v945
    %v947 = vrot.slane %v946, 1
    %v948 = vadd.f32 %v946, %v947
    %v949 = vadd.f32 %v859, %v948
    %s950 = scvt.s32.f32 %s877
    %v951 = vmax.f32 %v949, 1e-12
    %v952 = vrcp.pop %v951
    %v953 = vstv %s950
    %v954 = vmul.f32 %v948, %v953
    %v955 = vmul.f32 %v954, %v952
    %p956 = scmp.ge.s32.totalorder %s877, 16
    %p957 = scmp.le.s32.totalorder %s877, 64
    %p958 = pnand %p956, %p957
    %p959 = pneg %p958
    %vm960 = vcmp.lt.f32.partialorder %v955, %v875
    %s961 = scalar_select %p959, 1, 0
    %v962 = vstv %s961
    %vm963 = vcmp.eq.s32.totalorder %v962, 1
    %vm964 = vmand %vm963, %vm960
    %v965 = vsel %vm964, %v955, %v875
    %v966 = vsel %vm964, %v953, %v876
  $region10: #{librosa_f0_estimate.1} parent=0 // loop_footer
    %s244 = sadd.s32 1, %s240
  $region11: #{librosa_f0_estimate.1} parent=0 // loop_footer_branch
    %239 = sbr.rel target = $region7
  $region12: #{librosa_f0_estimate.1} parent=0 // loop_exit
    _
  %vm967 = vcmp.lt.f32.partialorder %v246, 0.3
  %vm968 = vcmp.gt.f32.partialorder %v245, 1e-09
  %vm969 = vmand %vm967, %vm968
  %v970 = vmax.f32 %v247, 1.0
  %v971 = vrcp.pop %v970
  %v972 = vmul.f32 %v970, %v971
  %v973 = vsub.f32 1.0, %v972
  %v974 = vmul.f32 %v971, %v973
  %v975 = vadd.f32 %v971, %v974
  %vm976 = vweird.f32 %v970
  %vm977 = vweird.f32 %v971
  %vm978 = vmor %vm976, %vm977
  %v979 = vsel %vm978, %v971, %v975
  %v980 = vand.u32 2147483647, %v970
  %vm981 = vcmp.eq.f32.partialorder %v980, 8.507059e+37
  %v982 = vand.u32 %v970, 2147483648
  %v983 = vor.u32 1.1754944e-38, %v982
  %v984 = vsel %vm981, %v983, %v979
  %v985 = vmul.f32 8000.0, %v984
  %v986 = vsel %vm969, %v985, 0.0
  %987 = vst [vmem:[%s1] sm:$0x1] %v986
  // Predicated region
  $region13: #{librosa_f0_estimate.1} parent=0 // pred_check
    _
  $region14: #{librosa_f0_estimate.1} parent=0 // pred_check_branch
    %989 = sbr.rel (0) target = $region16
  $region15: #{librosa_f0_estimate.1} parent=0 // pred_region
    _
  $region16: #{librosa_f0_estimate.1} parent=0 // pred_fallthru
    _
  // Predicated region
  $region17: #{librosa_f0_estimate.1} parent=0 // pred_check
    _
  $region18: #{librosa_f0_estimate.1} parent=0 // pred_check_branch
    %991 = sbr.rel (0) target = $region20
  $region19: #{librosa_f0_estimate.1} parent=0 // pred_region
    _
  $region20: #{librosa_f0_estimate.1} parent=0 // pred_fallthru
    _

</llo_original>
